<compile_context>
chip_gen: v5e
topology: v5e:2x2
jax: 0.10.0
libtpu: 0.0.40
codegen_flags: <defaults>
</compile_context>

<pallas_src>
import jax
import jax.numpy as jnp
from jax.experimental import pallas as pl
from jax.experimental.pallas import tpu as pltpu


def _round_up(a, m):
    return (a + m - 1) // m * m


def _const_spec(a):
    """Full-array block that never changes across the (b, n) grid."""
    nd = a.ndim
    return pl.BlockSpec(a.shape, lambda b, n, _nd=nd: (0,) * _nd)


# ----------------------------------------------------------------------------
# Parameter construction (deterministic, synthetic; BN folded into scale/shift)
# ----------------------------------------------------------------------------
def init_params(key, k):
    eps = 1e-5
    ks = list(jax.random.split(key, 22))

    def rnd(kk, shape, scale):
        return jax.random.normal(kk, shape, jnp.float32) * scale

    def bn_layer(kw, kb, kg, kbeta, cin, cout, wscale):
        W = rnd(kw, (cout, cin), wscale)            # PyTorch weight layout
        b = rnd(kb, (cout,), 0.05)
        gamma = 1.0 + rnd(kg, (cout,), 0.1)
        beta = rnd(kbeta, (cout,), 0.1)
        mean = jnp.zeros((cout,), jnp.float32)      # running stats at init
        var = jnp.ones((cout,), jnp.float32)
        s = gamma / jnp.sqrt(var + eps)
        t = beta + s * (b - mean)
        return W.T, s[None, :], t[None, :]          # (cin,cout), (1,cout), (1,cout)

    w1t, s1, t1 = bn_layer(ks[0], ks[1], ks[2], ks[3], k, 64, 0.2)
    w2t, s2, t2 = bn_layer(ks[4], ks[5], ks[6], ks[7], 64, 128, 0.1)
    w3t, s3, t3 = bn_layer(ks[8], ks[9], ks[10], ks[11], 128, 1024, 0.05)
    w4t, s4, t4 = bn_layer(ks[12], ks[13], ks[14], ks[15], 1024, 512, 0.03)
    w5t, s5, t5 = bn_layer(ks[16], ks[17], ks[18], ks[19], 512, 256, 0.05)
    W6 = rnd(ks[20], (k * k, 256), 0.05)
    b6 = rnd(ks[21], (k * k,), 0.05)
    return (w1t, s1, t1, w2t, s2, t2, w3t, s3, t3,
            w4t, s4, t4, w5t, s5, t5, W6.T, b6[None, :])


def _fold_scale_bf16(wt, s):
    """Fold BN scale into the (cin, cout) weight and cast to bf16 for the MXU."""
    return (wt * s).astype(jnp.bfloat16)


# ----------------------------------------------------------------------------
# Pallas wrapper: point MLP + max over points in one N-tiled kernel,
# FC head in plain XLA.
# ----------------------------------------------------------------------------
def stn_forward(x_bkn, params, k, *, tn=512):
    B, kk, N = x_bkn.shape
    assert kk == k
    (w1t, s1, t1, w2t, s2, t2, w3t, s3, t3,
     w4t, s4, t4, w5t, s5, t5, w6t, b6) = params

    # channels-last, bf16 for the MXU.  The (TN, k) tile is lane-padded to 128
    # lanes in VMEM (TN*128*2 B per buffer) -- tiny, accounted for below.
    x = jnp.transpose(x_bkn, (0, 2, 1)).astype(jnp.bfloat16)       # (B, N, k)

    # Tile the points axis.  TN multiple of 16 (bf16 sublane packing, and the
    # (TN//8, 8, ...) grouping used for the running max needs TN % 8 == 0).
    TN = tn if N >= tn else _round_up(N, 16)
    assert TN % 16 == 0
    n_pad = _round_up(N, TN)
    pad_needed = n_pad != N
    if pad_needed:
        x = jnp.pad(x, ((0, 0), (0, n_pad - N), (0, 0)))
    n_steps = n_pad // TN

    # BN scale folded into the weights (host side, once).
    w1b = _fold_scale_bf16(w1t, s1)                                 # (k,   64)
    w2b = _fold_scale_bf16(w2t, s2)                                 # (64, 128)
    w3b = _fold_scale_bf16(w3t, s3)                                 # (128,1024)

    def kernel(x_ref, w1_ref, t1_ref, w2_ref, t2_ref, w3_ref, t3_ref,
               out_ref, acc_ref):
        n_step = pl.program_id(1)

        x_blk = x_ref[0]                                            # (TN, k) bf16
        h1 = jnp.dot(x_blk, w1_ref[...], preferred_element_type=jnp.float32)
        h1 = jnp.maximum(h1 + t1_ref[...], 0.0)                     # (TN, 64)   f32
        h2 = jnp.dot(h1.astype(jnp.bfloat16), w2_ref[...],
                     preferred_element_type=jnp.float32)
        h2 = jnp.maximum(h2 + t2_ref[...], 0.0)                     # (TN, 128)  f32
        h3 = jnp.dot(h2.astype(jnp.bfloat16), w3_ref[...],
                     preferred_element_type=jnp.float32)
        h3 = jnp.maximum(h3 + t3_ref[...], 0.0)                     # (TN, 1024) f32

        if pad_needed:
            # Mask tail-padding rows out of the max (ReLU output >= 0, so 0 is
            # a safe neutral element and keeps everything on the VPU).
            rows = n_step * TN + jax.lax.broadcasted_iota(jnp.int32, (TN, 1), 0)
            h3 = jnp.where(rows < N, h3, 0.0)

        # Elementwise (VPU) running max over 8-row groups; the 8->1
        # cross-sublane reduce runs only once per batch at the last N step.
        partial = jnp.max(h3.reshape(TN // 8, 8, 1024), axis=0)     # (8, 1024)

        @pl.when(n_step == 0)
        def _():
            acc_ref[...] = jnp.zeros((8, 1024), jnp.float32)

        acc_ref[...] = jnp.maximum(acc_ref[...], partial)

        @pl.when(n_step == pl.num_programs(1) - 1)
        def _():
            out_ref[0] = jnp.max(acc_ref[...], axis=0, keepdims=True)

    flops = 2 * B * n_pad * (k * 64 + 64 * 128 + 128 * 1024)
    bytes_accessed = int(x.size) * 2 \
        + (k * 64 + 64 * 128 + 128 * 1024) * 2 \
        + (64 + 128 + 1024) * 4 \
        + B * 1024 * 4
    cost = pl.CostEstimate(flops=flops, transcendentals=0,
                           bytes_accessed=bytes_accessed)

    # VMEM at TN=512: bf16 x tile 2x128KiB, weights ~0.6MiB (double-buffered,
    # constant), f32 intermediates ~2.5MiB, acc 32KiB -> well under 32MiB.
    gmax3 = pl.pallas_call(
        kernel,
        out_shape=jax.ShapeDtypeStruct((B, 1, 1024), jnp.float32),
        grid=(B, n_steps),
        in_specs=[pl.BlockSpec((1, TN, k), lambda b, n: (b, n, 0)),
                  _const_spec(w1b), _const_spec(t1),
                  _const_spec(w2b), _const_spec(t2),
                  _const_spec(w3b), _const_spec(t3)],
        out_specs=pl.BlockSpec((1, 1, 1024), lambda b, n: (b, 0, 0)),
        scratch_shapes=[pltpu.VMEM((8, 1024), jnp.float32)],
        compiler_params=pltpu.CompilerParams(
            dimension_semantics=("parallel", "arbitrary"),
            vmem_limit_bytes=32 * 1024 * 1024),
        cost_estimate=cost,
    )(x, w1b, t1, w2b, t2, w3b, t3)
    gmax = gmax3.reshape(B, 1024)

    # FC head (1024->512->256->k*k) + identity: negligible FLOPs, plain XLA.
    f1 = jnp.maximum(gmax @ (w4t * s4) + t4, 0.0)
    f2 = jnp.maximum(f1 @ (w5t * s5) + t5, 0.0)
    ident = jnp.eye(k, dtype=jnp.float32).reshape(1, k * k)
    out = f2 @ w6t + b6 + ident
    return out.reshape(B, k, k)


# ----------------------------------------------------------------------------
# Pure-JAX reference (same math and same bf16 casts) for validation.
# ----------------------------------------------------------------------------
def ref_forward(x_bkn, params, k):
    (w1t, s1, t1, w2t, s2, t2, w3t, s3, t3,
     w4t, s4, t4, w5t, s5, t5, w6t, b6) = params
    x = jnp.transpose(x_bkn, (0, 2, 1)).astype(jnp.bfloat16)       # (B, N, k)
    w1b = _fold_scale_bf16(w1t, s1)
    w2b = _fold_scale_bf16(w2t, s2)
    w3b = _fold_scale_bf16(w3t, s3)

    h = jnp.maximum(jnp.dot(x, w1b, preferred_element_type=jnp.float32)
                    + t1, 0.0)
    h = jnp.maximum(jnp.dot(h.astype(jnp.bfloat16), w2b,
                            preferred_element_type=jnp.float32) + t2, 0.0)
    h = jnp.maximum(jnp.dot(h.astype(jnp.bfloat16), w3b,
                            preferred_element_type=jnp.float32) + t3, 0.0)
    g = jnp.max(h, axis=1)                                          # (B, 1024)

    f1 = jnp.maximum(g @ (w4t * s4) + t4, 0.0)
    f2 = jnp.maximum(f1 @ (w5t * s5) + t5, 0.0)
    out = f2 @ w6t + b6 + jnp.eye(k, dtype=jnp.float32).reshape(1, k * k)
    return out.reshape(B_global, k, k)


if __name__ == "__main__":
    # Small shapes consistent with the module: x is (B, k, N) like PyTorch.
    # tn=128 so the demo exercises multi-step N tiling + tail masking
    # (N=320 -> padded to 384 -> 3 N-steps per batch).
    B, k, N = 4, 3, 320
    B_global = B
    key = jax.random.PRNGKey(0)
    key_x, key_p = jax.random.split(key)
    x = jax.random.normal(key_x, (B, k, N), jnp.float32)
    params = init_params(key_p, k)

    out = stn_forward(x, params, k, tn=128)
    out = jax.block_until_ready(out)

    ref = ref_forward(x, params, k)
    assert out.shape == (B, k, k)
    assert jnp.allclose(out, ref, rtol=1e-2, atol=1e-2), "mismatch vs reference"
    print("KERNEL_OK")
</pallas_src>

<mosaic_0001>
module attributes {stable_mosaic.version = 11 : i64} {
  func.func @kernel(%arg0: i32, %arg1: i32, %arg2: memref<1x128x3xbf16, #tpu.memory_space<vmem>>, %arg3: memref<3x64xbf16, #tpu.memory_space<vmem>>, %arg4: memref<1x64xf32, #tpu.memory_space<vmem>>, %arg5: memref<64x128xbf16, #tpu.memory_space<vmem>>, %arg6: memref<1x128xf32, #tpu.memory_space<vmem>>, %arg7: memref<128x1024xbf16, #tpu.memory_space<vmem>>, %arg8: memref<1x1024xf32, #tpu.memory_space<vmem>>, %arg9: memref<1x1x1024xf32, #tpu.memory_space<vmem>>, %arg10: memref<8x1024xf32, #tpu.memory_space<vmem>>) attributes {dimension_semantics = [#tpu.dimension_semantics<parallel>, #tpu.dimension_semantics<arbitrary>], iteration_bounds = array<i64: 4, 3>, scalar_prefetch = 0 : i64, scratch_operands = 1 : i64, tpu.core_type = #tpu.core_type<tc>, window_params = [{transform_indices = @transform_0, window_bounds = array<i64: 1, 128, 3>}, {pipeline_mode = #tpu.pipeline_mode<synchronous>, transform_indices = @transform_1, window_bounds = array<i64: 3, 64>}, {pipeline_mode = #tpu.pipeline_mode<synchronous>, transform_indices = @transform_2, window_bounds = array<i64: 1, 64>}, {pipeline_mode = #tpu.pipeline_mode<synchronous>, transform_indices = @transform_3, window_bounds = array<i64: 64, 128>}, {pipeline_mode = #tpu.pipeline_mode<synchronous>, transform_indices = @transform_4, window_bounds = array<i64: 1, 128>}, {pipeline_mode = #tpu.pipeline_mode<synchronous>, transform_indices = @transform_5, window_bounds = array<i64: 128, 1024>}, {pipeline_mode = #tpu.pipeline_mode<synchronous>, transform_indices = @transform_6, window_bounds = array<i64: 1, 1024>}, {transform_indices = @transform_7, window_bounds = array<i64: 1, 1, 1024>}]} {
    %c0 = arith.constant 0 : index
    %c0_0 = arith.constant 0 : index
    %c0_1 = arith.constant 0 : index
    %0 = vector.load %arg2[%c0, %c0_0, %c0_1] : memref<1x128x3xbf16, #tpu.memory_space<vmem>>, vector<1x128x3xbf16>
    %1 = vector.shape_cast %0 : vector<1x128x3xbf16> to vector<128x3xbf16>
    %c0_2 = arith.constant 0 : index
    %c0_3 = arith.constant 0 : index
    %2 = vector.load %arg3[%c0_2, %c0_3] : memref<3x64xbf16, #tpu.memory_space<vmem>>, vector<3x64xbf16>
    %cst = arith.constant dense<0.000000e+00> : vector<128x64xf32>
    %3 = tpu.matmul %1, %2, %cst {dimension_numbers = #tpu.dot_dimension_numbers<[1], [0], [0], [1], [0, 0, 1, 1], [], []>} : vector<128x3xbf16>, vector<3x64xbf16>, vector<128x64xf32> -> vector<128x64xf32>
    %c0_4 = arith.constant 0 : index
    %c0_5 = arith.constant 0 : index
    %4 = vector.load %arg4[%c0_4, %c0_5] : memref<1x64xf32, #tpu.memory_space<vmem>>, vector<1x64xf32>
    %5 = vector.broadcast %4 : vector<1x64xf32> to vector<128x64xf32>
    %6 = arith.addf %3, %5 : vector<128x64xf32>
    %cst_6 = arith.constant 0.000000e+00 : f32
    %7 = vector.broadcast %cst_6 : f32 to vector<128x64xf32>
    %8 = arith.maximumf %6, %7 : vector<128x64xf32>
    %9 = arith.truncf %8 : vector<128x64xf32> to vector<128x64xbf16>
    %c0_7 = arith.constant 0 : index
    %c0_8 = arith.constant 0 : index
    %10 = vector.load %arg5[%c0_7, %c0_8] : memref<64x128xbf16, #tpu.memory_space<vmem>>, vector<64x128xbf16>
    %cst_9 = arith.constant dense<0.000000e+00> : vector<128x128xf32>
    %11 = tpu.matmul %9, %10, %cst_9 {dimension_numbers = #tpu.dot_dimension_numbers<[1], [0], [0], [1], [0, 0, 1, 1], [], []>} : vector<128x64xbf16>, vector<64x128xbf16>, vector<128x128xf32> -> vector<128x128xf32>
    %c0_10 = arith.constant 0 : index
    %c0_11 = arith.constant 0 : index
    %12 = vector.load %arg6[%c0_10, %c0_11] : memref<1x128xf32, #tpu.memory_space<vmem>>, vector<1x128xf32>
    %13 = vector.broadcast %12 : vector<1x128xf32> to vector<128x128xf32>
    %14 = arith.addf %11, %13 : vector<128x128xf32>
    %cst_12 = arith.constant 0.000000e+00 : f32
    %15 = vector.broadcast %cst_12 : f32 to vector<128x128xf32>
    %16 = arith.maximumf %14, %15 : vector<128x128xf32>
    %17 = arith.truncf %16 : vector<128x128xf32> to vector<128x128xbf16>
    %c0_13 = arith.constant 0 : index
    %c0_14 = arith.constant 0 : index
    %18 = vector.load %arg7[%c0_13, %c0_14] : memref<128x1024xbf16, #tpu.memory_space<vmem>>, vector<128x1024xbf16>
    %cst_15 = arith.constant dense<0.000000e+00> : vector<128x1024xf32>
    %19 = tpu.matmul %17, %18, %cst_15 {dimension_numbers = #tpu.dot_dimension_numbers<[1], [0], [0], [1], [0, 0, 1, 1], [], []>} : vector<128x128xbf16>, vector<128x1024xbf16>, vector<128x1024xf32> -> vector<128x1024xf32>
    %c0_16 = arith.constant 0 : index
    %c0_17 = arith.constant 0 : index
    %20 = vector.load %arg8[%c0_16, %c0_17] : memref<1x1024xf32, #tpu.memory_space<vmem>>, vector<1x1024xf32>
    %21 = vector.broadcast %20 : vector<1x1024xf32> to vector<128x1024xf32>
    %22 = arith.addf %19, %21 : vector<128x1024xf32>
    %cst_18 = arith.constant 0.000000e+00 : f32
    %23 = vector.broadcast %cst_18 : f32 to vector<128x1024xf32>
    %24 = arith.maximumf %22, %23 : vector<128x1024xf32>
    %c128_i32 = arith.constant 128 : i32
    %25 = arith.muli %arg1, %c128_i32 : i32
    %26 = tpu.iota {dimensions = array<i32: 0>} : vector<128x1xi32>
    %27 = vector.broadcast %25 : i32 to vector<128x1xi32>
    %28 = arith.addi %27, %26 : vector<128x1xi32>
    %c320_i32 = arith.constant 320 : i32
    %29 = vector.broadcast %c320_i32 : i32 to vector<128x1xi32>
    %30 = arith.cmpi slt, %28, %29 : vector<128x1xi32>
    %cst_19 = arith.constant 0.000000e+00 : f32
    %31 = vector.shape_cast %30 : vector<128x1xi1> to vector<128x1xi1>
    %32 = vector.broadcast %31 : vector<128x1xi1> to vector<128x1024xi1>
    %33 = vector.broadcast %cst_19 : f32 to vector<128x1024xf32>
    %34 = arith.select %32, %24, %33 : vector<128x1024xi1>, vector<128x1024xf32>
    %35 = vector.shape_cast %34 : vector<128x1024xf32> to vector<16x8x1024xf32>
    %cst_20 = arith.constant dense<0xFF800000> : vector<8x1024xf32>
    %36 = vector.multi_reduction <maximumf>, %35, %cst_20 [0] : vector<16x8x1024xf32> to vector<8x1024xf32>
    %c0_i32 = arith.constant 0 : i32
    %37 = arith.cmpi eq, %arg1, %c0_i32 : i32
    %38 = arith.extui %37 : i1 to i32
    %c0_i32_21 = arith.constant 0 : i32
    %39 = arith.cmpi ne, %38, %c0_i32_21 : i32
    scf.if %39 {
      %cst_27 = arith.constant 0.000000e+00 : f32
      %46 = vector.broadcast %cst_27 : f32 to vector<8x1024xf32>
      %c0_28 = arith.constant 0 : index
      %c0_29 = arith.constant 0 : index
      %47 = vector.load %arg10[%c0_28, %c0_29] : memref<8x1024xf32, #tpu.memory_space<vmem>>, vector<8x1024xf32>
      tpu.vector_store %arg10[%c0_28, %c0_29], %46 {strides = array<i32>} : memref<8x1024xf32, #tpu.memory_space<vmem>>, vector<8x1024xf32>,
    } else {
    }
    %c0_22 = arith.constant 0 : index
    %c0_23 = arith.constant 0 : index
    %40 = vector.load %arg10[%c0_22, %c0_23] : memref<8x1024xf32, #tpu.memory_space<vmem>>, vector<8x1024xf32>
    %41 = arith.maximumf %40, %36 : vector<8x1024xf32>
    %c0_24 = arith.constant 0 : index
    %c0_25 = arith.constant 0 : index
    %42 = vector.load %arg10[%c0_24, %c0_25] : memref<8x1024xf32, #tpu.memory_space<vmem>>, vector<8x1024xf32>
    tpu.vector_store %arg10[%c0_24, %c0_25], %41 {strides = array<i32>} : memref<8x1024xf32, #tpu.memory_space<vmem>>, vector<8x1024xf32>,
    %c2_i32 = arith.constant 2 : i32
    %43 = arith.cmpi eq, %arg1, %c2_i32 : i32
    %44 = arith.extui %43 : i1 to i32
    %c0_i32_26 = arith.constant 0 : i32
    %45 = arith.cmpi ne, %44, %c0_i32_26 : i32
    scf.if %45 {
      %c0_27 = arith.constant 0 : index
      %c0_28 = arith.constant 0 : index
      %46 = vector.load %arg10[%c0_27, %c0_28] : memref<8x1024xf32, #tpu.memory_space<vmem>>, vector<8x1024xf32>
      %cst_29 = arith.constant dense<0xFF800000> : vector<1024xf32>
      %47 = vector.multi_reduction <maximumf>, %46, %cst_29 [0] : vector<8x1024xf32> to vector<1024xf32>
      %48 = vector.shape_cast %47 : vector<1024xf32> to vector<1x1024xf32>
      %c0_30 = arith.constant 0 : index
      %c0_31 = arith.constant 0 : index
      %c0_32 = arith.constant 0 : index
      %49 = vector.load %arg9[%c0_30, %c0_31, %c0_32] : memref<1x1x1024xf32, #tpu.memory_space<vmem>>, vector<1x1x1024xf32>
      %50 = vector.shape_cast %49 : vector<1x1x1024xf32> to vector<1x1024xf32>
      %51 = vector.shape_cast %48 : vector<1x1024xf32> to vector<1x1x1024xf32>
      tpu.vector_store %arg9[%c0_30, %c0_31, %c0_32], %51 {strides = array<i32>} : memref<1x1x1024xf32, #tpu.memory_space<vmem>>, vector<1x1x1024xf32>,
    } else {
    }
    return
  }
  func.func @transform_0(%arg0: i32, %arg1: i32) -> (i32, i32, i32) {
    %c0_i32 = arith.constant 0 : i32
    %c0_i32_0 = arith.constant 0 : i32
    return %arg0, %arg1, %c0_i32 : i32, i32, i32
  }
  func.func @transform_1(%arg0: i32, %arg1: i32) -> (i32, i32) {
    %c0_i32 = arith.constant 0 : i32
    %c0_i32_0 = arith.constant 0 : i32
    %c0_i32_1 = arith.constant 0 : i32
    return %c0_i32, %c0_i32_0 : i32, i32
  }
  func.func @transform_2(%arg0: i32, %arg1: i32) -> (i32, i32) {
    %c0_i32 = arith.constant 0 : i32
    %c0_i32_0 = arith.constant 0 : i32
    %c0_i32_1 = arith.constant 0 : i32
    return %c0_i32, %c0_i32_0 : i32, i32
  }
  func.func @transform_3(%arg0: i32, %arg1: i32) -> (i32, i32) {
    %c0_i32 = arith.constant 0 : i32
    %c0_i32_0 = arith.constant 0 : i32
    %c0_i32_1 = arith.constant 0 : i32
    return %c0_i32, %c0_i32_0 : i32, i32
  }
  func.func @transform_4(%arg0: i32, %arg1: i32) -> (i32, i32) {
    %c0_i32 = arith.constant 0 : i32
    %c0_i32_0 = arith.constant 0 : i32
    %c0_i32_1 = arith.constant 0 : i32
    return %c0_i32, %c0_i32_0 : i32, i32
  }
  func.func @transform_5(%arg0: i32, %arg1: i32) -> (i32, i32) {
    %c0_i32 = arith.constant 0 : i32
    %c0_i32_0 = arith.constant 0 : i32
    %c0_i32_1 = arith.constant 0 : i32
    return %c0_i32, %c0_i32_0 : i32, i32
  }
  func.func @transform_6(%arg0: i32, %arg1: i32) -> (i32, i32) {
    %c0_i32 = arith.constant 0 : i32
    %c0_i32_0 = arith.constant 0 : i32
    %c0_i32_1 = arith.constant 0 : i32
    return %c0_i32, %c0_i32_0 : i32, i32
  }
  func.func @transform_7(%arg0: i32, %arg1: i32) -> (i32, i32, i32) {
    %c0_i32 = arith.constant 0 : i32
    %c0_i32_0 = arith.constant 0 : i32
    %c0_i32_1 = arith.constant 0 : i32
    return %arg0, %c0_i32, %c0_i32_0 : i32, i32, i32
  }
}

</mosaic_0001>

<llo_original>
// kernel: tpu_custom_call.1
$region0: #{tpu_custom_call.1}
  #allocation0 [shape = 'u32[]', space=smem, size = 0x4, offset = 0x4, fixed_abs, tag = 'smem constant byte address 0x4 - core index']
  #allocation1 [shape = 'u32[72,128]{1,0:T(1,128)}', space=vmem, size = 0x9000, scoped, tag = 'internal scratch']
  #allocation2 [shape = 'f32[8,1024]{1,0:T(8,128)}', space=vmem, size = 0x8000, scoped, tag = 'scratch operand']
  %s0 = inlined_call_operand.vmem [shape: bf16[4,384,3], index: 0, kind: input, shape index: {}]
  %s1 = inlined_call_operand.vmem [shape: bf16[3,64], index: 1, kind: input, shape index: {}]
  %s2 = inlined_call_operand.vmem [shape: f32[1,64], index: 2, kind: input, shape index: {}]
  %s3 = inlined_call_operand.vmem [shape: bf16[64,128], index: 3, kind: input, shape index: {}]
  %s4 = inlined_call_operand.vmem [shape: f32[1,128], index: 4, kind: input, shape index: {}]
  %s5 = inlined_call_operand.vmem [shape: bf16[128,1024], index: 5, kind: input, shape index: {}]
  %s6 = inlined_call_operand.vmem [shape: f32[1,1024], index: 6, kind: input, shape index: {}]
  %s7 = inlined_call_operand.hbm [shape: f32[4,1,1024], index: 7, kind: output, shape index: {}]
  %s8 = sld [smem:[#allocation0]]
  $region69: #{tpu_custom_call.1} parent=0
    _
  %s10 = ssub.s32 1, %s8
  %s11 = scalar_select 0, %s10, %s8
  $region1: #{tpu_custom_call.1} parent=0
    #allocation3 [shape = 'u8[8192]{0}', space=vmem, size = 0x2000, scoped, tag = 'output window, operand 0']
    #allocation4 [shape = 's32[2]{0}', space=sflag, size = 0x8, scoped, tag = 'scoped memory for tpu_custom_call.1']
    %12 = vsyncpa [#allocation4], 0
    %s13 = scalar_lea.sflag [#allocation4], 1
    %14 = vsyncpa %s13, 0
    loop: start=0, step=1, limit=14
    $region2: #{tpu_custom_call.1} parent=1 // loop_pre_header
      _
    $region3: #{tpu_custom_call.1} parent=1 // loop_header
      %s16 = sphi 0, %s20
      %p17 = scmp.ge.s32.totalorder %s16, 14
      %s23 = sphi 0, %s35
      %s24 = sphi 0, %s31
      %s25 = sphi 0, %s23
      %s26 = sphi 0, %s24
      %s27 = sphi 0, %s25
      %s28 = sphi 0, %s26
      %s40 = sphi 0, %s42
      %s43 = sphi 0, %s40
      %s44 = sphi 0, %s43
      %s60 = sphi 0, %s44
      %s64 = sphi 0, %s64
      %s66 = sphi 0, %s64
      %s67 = sphi 0, %s66
      %s81 = sphi 0, %s67
      %s85 = sphi 0, %s85
      %s87 = sphi 0, %s85
      %s88 = sphi 0, %s87
      %s102 = sphi 0, %s88
      %s106 = sphi 0, %s106
      %s108 = sphi 0, %s106
      %s109 = sphi 0, %s108
      %s123 = sphi 0, %s109
      %s127 = sphi 0, %s127
      %s129 = sphi 0, %s127
      %s130 = sphi 0, %s129
      %s144 = sphi 0, %s130
      %s148 = sphi 0, %s148
      %s150 = sphi 0, %s148
      %s151 = sphi 0, %s150
      %s165 = sphi 0, %s151
      %s169 = sphi 0, %s169
      %s171 = sphi 0, %s169
      %s172 = sphi 0, %s171
      %s186 = sphi 0, %s172
      %s192 = sphi 0, %s194
      %s195 = sphi 0, %s192
      %s196 = sphi 0, %s195
      %s212 = sphi 0, %s196
    $region4: #{tpu_custom_call.1} parent=1 // loop_header_branch
      %19 = sbr.rel (%p17) target = $region8
    $region5: #{tpu_custom_call.1} parent=1 // loop_body
      %s21 = ssub.s32 %s16, 1
      %s22 = ssub.s32 %s16, 2
      %s29 = sadd.s32 1, %s24
      %p30 = scmp.ge.s32.totalorder %s29, 3
      %s31 = scalar_select %p30, 0, %s29
      %s32 = sadd.s32 1, %s23
      %s33 = scalar_select %p30, %s32, %s23
      %p34 = scmp.ge.s32.totalorder %s33, 4
      %s35 = scalar_select %p34, 0, %s33
      %s36 = ssub.s32 %s23, %s35
      %s37 = ssub.s32 %s24, %s31
      %s38 = sor.u32 %s36, %s37
      %p39 = scmp.eq.s32.totalorder %s38, 0
      %s41 = sadd.s32 %s40, 1
      %s42 = scalar_select %p39, %s40, %s41
      %p45 = pneg %p39
      %p46 = scmp.eq.s32.totalorder %s16, 11
      %p47 = por %p45, %p46
      %p48 = scmp.ne.s32.totalorder %s40, %s43
      %p49 = scmp.eq.s32.totalorder %s16, 0
      %p50 = por %p48, %p49
      %p51 = scmp.ne.s32.totalorder %s40, %s43
      %p52 = scmp.eq.s32.totalorder %s21, 11
      %p53 = por %p51, %p52
      %p54 = scmp.ne.s32.totalorder %s43, %s44
      %p55 = scmp.eq.s32.totalorder %s21, 0
      %p56 = por %p54, %p55
      %p57 = scmp.ne.s32.totalorder %s43, %s44
      %p58 = scmp.eq.s32.totalorder %s22, 11
      %p59 = por %p57, %p58
      %p61 = scmp.ne.s32.totalorder %s44, %s60
      %p62 = scmp.eq.s32.totalorder %s22, 0
      %p63 = por %p61, %p62
      %s65 = sadd.s32 %s64, 1
      %p68 = scmp.eq.s32.totalorder %s16, 11
      %p69 = scmp.ne.s32.totalorder %s64, %s66
      %p70 = scmp.eq.s32.totalorder %s16, 0
      %p71 = por %p69, %p70
      %p72 = scmp.ne.s32.totalorder %s64, %s66
      %p73 = scmp.eq.s32.totalorder %s21, 11
      %p74 = por %p72, %p73
      %p75 = scmp.ne.s32.totalorder %s66, %s67
      %p76 = scmp.eq.s32.totalorder %s21, 0
      %p77 = por %p75, %p76
      %p78 = scmp.ne.s32.totalorder %s66, %s67
      %p79 = scmp.eq.s32.totalorder %s22, 11
      %p80 = por %p78, %p79
      %p82 = scmp.ne.s32.totalorder %s67, %s81
      %p83 = scmp.eq.s32.totalorder %s22, 0
      %p84 = por %p82, %p83
      %s86 = sadd.s32 %s85, 1
      %p89 = scmp.eq.s32.totalorder %s16, 11
      %p90 = scmp.ne.s32.totalorder %s85, %s87
      %p91 = scmp.eq.s32.totalorder %s16, 0
      %p92 = por %p90, %p91
      %p93 = scmp.ne.s32.totalorder %s85, %s87
      %p94 = scmp.eq.s32.totalorder %s21, 11
      %p95 = por %p93, %p94
      %p96 = scmp.ne.s32.totalorder %s87, %s88
      %p97 = scmp.eq.s32.totalorder %s21, 0
      %p98 = por %p96, %p97
      %p99 = scmp.ne.s32.totalorder %s87, %s88
      %p100 = scmp.eq.s32.totalorder %s22, 11
      %p101 = por %p99, %p100
      %p103 = scmp.ne.s32.totalorder %s88, %s102
      %p104 = scmp.eq.s32.totalorder %s22, 0
      %p105 = por %p103, %p104
      %s107 = sadd.s32 %s106, 1
      %p110 = scmp.eq.s32.totalorder %s16, 11
      %p111 = scmp.ne.s32.totalorder %s106, %s108
      %p112 = scmp.eq.s32.totalorder %s16, 0
      %p113 = por %p111, %p112
      %p114 = scmp.ne.s32.totalorder %s106, %s108
      %p115 = scmp.eq.s32.totalorder %s21, 11
      %p116 = por %p114, %p115
      %p117 = scmp.ne.s32.totalorder %s108, %s109
      %p118 = scmp.eq.s32.totalorder %s21, 0
      %p119 = por %p117, %p118
      %p120 = scmp.ne.s32.totalorder %s108, %s109
      %p121 = scmp.eq.s32.totalorder %s22, 11
      %p122 = por %p120, %p121
      %p124 = scmp.ne.s32.totalorder %s109, %s123
      %p125 = scmp.eq.s32.totalorder %s22, 0
      %p126 = por %p124, %p125
      %s128 = sadd.s32 %s127, 1
      %p131 = scmp.eq.s32.totalorder %s16, 11
      %p132 = scmp.ne.s32.totalorder %s127, %s129
      %p133 = scmp.eq.s32.totalorder %s16, 0
      %p134 = por %p132, %p133
      %p135 = scmp.ne.s32.totalorder %s127, %s129
      %p136 = scmp.eq.s32.totalorder %s21, 11
      %p137 = por %p135, %p136
      %p138 = scmp.ne.s32.totalorder %s129, %s130
      %p139 = scmp.eq.s32.totalorder %s21, 0
      %p140 = por %p138, %p139
      %p141 = scmp.ne.s32.totalorder %s129, %s130
      %p142 = scmp.eq.s32.totalorder %s22, 11
      %p143 = por %p141, %p142
      %p145 = scmp.ne.s32.totalorder %s130, %s144
      %p146 = scmp.eq.s32.totalorder %s22, 0
      %p147 = por %p145, %p146
      %s149 = sadd.s32 %s148, 1
      %p152 = scmp.eq.s32.totalorder %s16, 11
      %p153 = scmp.ne.s32.totalorder %s148, %s150
      %p154 = scmp.eq.s32.totalorder %s16, 0
      %p155 = por %p153, %p154
      %p156 = scmp.ne.s32.totalorder %s148, %s150
      %p157 = scmp.eq.s32.totalorder %s21, 11
      %p158 = por %p156, %p157
      %p159 = scmp.ne.s32.totalorder %s150, %s151
      %p160 = scmp.eq.s32.totalorder %s21, 0
      %p161 = por %p159, %p160
      %p162 = scmp.ne.s32.totalorder %s150, %s151
      %p163 = scmp.eq.s32.totalorder %s22, 11
      %p164 = por %p162, %p163
      %p166 = scmp.ne.s32.totalorder %s151, %s165
      %p167 = scmp.eq.s32.totalorder %s22, 0
      %p168 = por %p166, %p167
      %s170 = sadd.s32 %s169, 1
      %p173 = scmp.eq.s32.totalorder %s16, 11
      %p174 = scmp.ne.s32.totalorder %s169, %s171
      %p175 = scmp.eq.s32.totalorder %s16, 0
      %p176 = por %p174, %p175
      %p177 = scmp.ne.s32.totalorder %s169, %s171
      %p178 = scmp.eq.s32.totalorder %s21, 11
      %p179 = por %p177, %p178
      %p180 = scmp.ne.s32.totalorder %s171, %s172
      %p181 = scmp.eq.s32.totalorder %s21, 0
      %p182 = por %p180, %p181
      %p183 = scmp.ne.s32.totalorder %s171, %s172
      %p184 = scmp.eq.s32.totalorder %s22, 11
      %p185 = por %p183, %p184
      %p187 = scmp.ne.s32.totalorder %s172, %s186
      %p188 = scmp.eq.s32.totalorder %s22, 0
      %p189 = por %p187, %p188
      %s190 = ssub.s32 %s23, %s35
      %p191 = scmp.eq.s32.totalorder %s190, 0
      %s193 = sadd.s32 %s192, 1
      %s194 = scalar_select %p191, %s192, %s193
      %p197 = pneg %p191
      %p198 = scmp.eq.s32.totalorder %s16, 11
      %p199 = por %p197, %p198
      %p200 = scmp.ne.s32.totalorder %s192, %s195
      %p201 = scmp.eq.s32.totalorder %s16, 0
      %p202 = por %p200, %p201
      %p203 = scmp.ne.s32.totalorder %s192, %s195
      %p204 = scmp.eq.s32.totalorder %s21, 11
      %p205 = por %p203, %p204
      %p206 = scmp.ne.s32.totalorder %s195, %s196
      %p207 = scmp.eq.s32.totalorder %s21, 0
      %p208 = por %p206, %p207
      %p209 = scmp.ne.s32.totalorder %s195, %s196
      %p210 = scmp.eq.s32.totalorder %s22, 11
      %p211 = por %p209, %p210
      %p213 = scmp.ne.s32.totalorder %s196, %s212
      %p214 = scmp.eq.s32.totalorder %s22, 0
      %p215 = por %p213, %p214
      %p216 = scmp.le.s32.totalorder 1, %s16
      %p217 = scmp.lt.s32.totalorder %s16, 13
      %p218 = pnand %p216, %p217
      %p219 = pneg %p218
      // Predicated region
      $region9: #{tpu_custom_call.1} parent=5 // pred_check
        _
      $region10: #{tpu_custom_call.1} parent=5 // pred_check_branch
        %221 = sbr.rel (%p218) target = $region12
      $region11: #{tpu_custom_call.1} parent=5 // pred_region
        %s222 = ssub.s32 %s16, 1
        // Predicated region
        $region13: #{tpu_custom_call.1} parent=11 // pred_check
          %p223 = pneg %p77
        $region14: #{tpu_custom_call.1} parent=11 // pred_check_branch
          %225 = sbr.rel (%p223) target = $region16
        $region15: #{tpu_custom_call.1} parent=11 // pred_region
          _
        $region16: #{tpu_custom_call.1} parent=11 // pred_fallthru
          _
        // Predicated region
        $region17: #{tpu_custom_call.1} parent=11 // pred_check
          %p226 = pneg %p98
        $region18: #{tpu_custom_call.1} parent=11 // pred_check_branch
          %228 = sbr.rel (%p226) target = $region20
        $region19: #{tpu_custom_call.1} parent=11 // pred_region
          _
        $region20: #{tpu_custom_call.1} parent=11 // pred_fallthru
          _
        // Predicated region
        $region21: #{tpu_custom_call.1} parent=11 // pred_check
          %p229 = pneg %p119
        $region22: #{tpu_custom_call.1} parent=11 // pred_check_branch
          %231 = sbr.rel (%p229) target = $region24
        $region23: #{tpu_custom_call.1} parent=11 // pred_region
          _
        $region24: #{tpu_custom_call.1} parent=11 // pred_fallthru
          _
        // Predicated region
        $region25: #{tpu_custom_call.1} parent=11 // pred_check
          %p232 = pneg %p140
        $region26: #{tpu_custom_call.1} parent=11 // pred_check_branch
          %234 = sbr.rel (%p232) target = $region28
        $region27: #{tpu_custom_call.1} parent=11 // pred_region
          _
        $region28: #{tpu_custom_call.1} parent=11 // pred_fallthru
          _
        // Predicated region
        $region29: #{tpu_custom_call.1} parent=11 // pred_check
          %p235 = pneg %p161
        $region30: #{tpu_custom_call.1} parent=11 // pred_check_branch
          %237 = sbr.rel (%p235) target = $region32
        $region31: #{tpu_custom_call.1} parent=11 // pred_region
          _
        $region32: #{tpu_custom_call.1} parent=11 // pred_fallthru
          _
        // Predicated region
        $region33: #{tpu_custom_call.1} parent=11 // pred_check
          %p238 = pneg %p182
        $region34: #{tpu_custom_call.1} parent=11 // pred_check_branch
          %240 = sbr.rel (%p238) target = $region36
        $region35: #{tpu_custom_call.1} parent=11 // pred_region
          _
        $region36: #{tpu_custom_call.1} parent=11 // pred_fallthru
          _
      $region12: #{tpu_custom_call.1} parent=5 // pred_fallthru
        _
      %p241 = scmp.lt.s32.totalorder %s16, 12
      // Predicated region
      $region37: #{tpu_custom_call.1} parent=5 // pred_check
        %p242 = pneg %p241
      $region38: #{tpu_custom_call.1} parent=5 // pred_check_branch
        %244 = sbr.rel (%p242) target = $region40
      $region39: #{tpu_custom_call.1} parent=5 // pred_region
        // Predicated region
        $region41: #{tpu_custom_call.1} parent=39 // pred_check
          %p245 = pneg %p50
        $region42: #{tpu_custom_call.1} parent=39 // pred_check_branch
          %247 = sbr.rel (%p245) target = $region44
        $region43: #{tpu_custom_call.1} parent=39 // pred_region
          %s248 = smul.u32 16, %s24
          %p249 = scmp.lt.s32.totalorder %s23, 3
          %s250 = scalar_select %p249, %s23, 3
          %p251 = scmp.lt.s32.totalorder %s248, 47
          %s252 = scalar_select %p251, %s248, 47
          %s253 = smul.addr %s250, 48
          %s254 = sadd.s32 %s252, %s253
          %s255 = smul.addr %s254, 4
          %s256 = scalar_lea.vmem %s0, %s255
          %s257 = smul.u32 16, %s24
        $region44: #{tpu_custom_call.1} parent=39 // pred_fallthru
          _
      $region40: #{tpu_custom_call.1} parent=5 // pred_fallthru
        _
      %p258 = scmp.le.s32.totalorder 1, %s16
      %p259 = scmp.lt.s32.totalorder %s16, 13
      %p260 = pnand %p258, %p259
      %p261 = pneg %p260
      // Predicated region
      $region45: #{tpu_custom_call.1} parent=5 // pred_check
        _
      $region46: #{tpu_custom_call.1} parent=5 // pred_check_branch
        %263 = sbr.rel (%p260) target = $region48
      $region47: #{tpu_custom_call.1} parent=5 // pred_region
        %s264 = ssub.s32 %s16, 1
        %s265 = smul.u32 16, %s26
        %p266 = scmp.lt.s32.totalorder %s25, 3
        %s267 = scalar_select %p266, %s25, 3
        %p268 = scmp.lt.s32.totalorder %s265, 47
        %s269 = scalar_select %p268, %s265, 47
        %s270 = smul.addr %s267, 48
        %s271 = sadd.s32 %s269, %s270
        %s272 = smul.addr %s271, 4
        %s273 = scalar_lea.vmem %s0, %s272
        %p274 = pneg %p56
        %p275 = pneg %p53
        %p276 = pneg %p77
        %p277 = pneg %p74
        %p278 = pneg %p98
        %p279 = pneg %p95
        %p280 = pneg %p119
        %p281 = pneg %p116
        %p282 = pneg %p140
        %p283 = pneg %p137
        %p284 = pneg %p161
        %p285 = pneg %p158
        %p286 = pneg %p182
        %p287 = pneg %p179
        %p288 = pneg %p208
        %p289 = pneg %p205
        %s290 = sand.u32 %s195, 1
        %s291 = scalar_lea.sflag [#allocation4], %s290
        %s292 = sand.u32 %s195, 1
        %s293 = smul.addr %s292, 8
        %s294 = scalar_lea.vmem [#allocation3], %s293
        %s295 = smul.u32 16, %s26
        %p296 = scmp.lt.s32.totalorder %s25, 3
        %s297 = scalar_select %p296, %s25, 3
        %p298 = scmp.lt.s32.totalorder %s295, 47
        %s299 = scalar_select %p298, %s295, 47
        %s300 = smul.addr %s297, 48
        %s301 = sadd.s32 %s299, %s300
        %s302 = smul.addr %s301, 4
        %s303 = scalar_lea.vmem %s0, %s302
        %s304 = smul.u32 16, %s26
        %v306 = vld [vmem:[%s303] sm:$0xf]
        %v307 = vld [vmem:[%s303 + $0x4] sm:$0xf]
        %v308 = vld [vmem:[%s303 + $0x8] sm:$0xf]
        %v309 = vld [vmem:[%s303 + $0xc] sm:$0xf]
        %v310 = vld [vmem:[%s303 + $0x10] sm:$0xf]
        %v311 = vld [vmem:[%s303 + $0x14] sm:$0xf]
        %v312 = vld [vmem:[%s303 + $0x18] sm:$0xf]
        %v313 = vld [vmem:[%s303 + $0x1c] sm:$0xf]
        %v314 = vld [vmem:[%s303 + $0x20] sm:$0xf]
        %v315 = vld [vmem:[%s303 + $0x24] sm:$0xf]
        %v316 = vld [vmem:[%s303 + $0x28] sm:$0xf]
        %v317 = vld [vmem:[%s303 + $0x2c] sm:$0xf]
        %v318 = vld [vmem:[%s303 + $0x30] sm:$0xf]
        %v319 = vld [vmem:[%s303 + $0x34] sm:$0xf]
        %v320 = vld [vmem:[%s303 + $0x38] sm:$0xf]
        %v321 = vld [vmem:[%s303 + $0x3c] sm:$0xf]
        %v322 = vld [vmem:[%s1] sm:$0x3]
        %v323 = vld [vmem:[%s2] sm:$0x1]
        %v325 = vperm.slane %v323, 0
        %v343 = vunpack.c.l.b16 %v306
        %v344 = vunpack.c.l.b16 %v307
        %v345 = vunpack.c.l.b16 %v308
        %v346 = vunpack.c.l.b16 %v309
        %v347 = vunpack.c.l.b16 %v310
        %v348 = vunpack.c.l.b16 %v311
        %v349 = vunpack.c.l.b16 %v312
        %v350 = vunpack.c.l.b16 %v313
        %v351 = vunpack.c.l.b16 %v314
        %v352 = vunpack.c.l.b16 %v315
        %v353 = vunpack.c.l.b16 %v316
        %v354 = vunpack.c.l.b16 %v317
        %v355 = vunpack.c.l.b16 %v318
        %v356 = vunpack.c.l.b16 %v319
        %v357 = vunpack.c.l.b16 %v320
        %v358 = vunpack.c.l.b16 %v321
        %v359 = vpack.c.b16 %v344, %v343
        %v360 = vpack.c.b16 %v346, %v345
        %v361 = vpack.c.b16 %v348, %v347
        %v362 = vpack.c.b16 %v350, %v349
        %v363 = vpack.c.b16 %v352, %v351
        %v364 = vpack.c.b16 %v354, %v353
        %v365 = vpack.c.b16 %v356, %v355
        %v366 = vpack.c.b16 %v358, %v357
        %vm367 = vcmask 23552
        %v369 = vsel %vm367, %v359, 0
        %v372 = vsel %vm367, %v360, 0
        %v375 = vsel %vm367, %v361, 0
        %v378 = vsel %vm367, %v362, 0
        %v381 = vsel %vm367, %v363, 0
        %v384 = vsel %vm367, %v364, 0
        %v387 = vsel %vm367, %v365, 0
        %v390 = vsel %vm367, %v366, 0
        %vm392 = vcmask 1040384
        %vm393 = vcmask 1041408
        %v394 = vsel %vm392, 4294967295, 65535
        %v395 = vsel %vm393, %v394, 0
        %v397 = vand.u32 %v322, %v395
        %399 = vmatpush.bf16.msra.mxu0 0
        %400 = vmatpush.bf16.msra.mxu0 0
        %401 = vmatpush.bf16.msra.mxu0 0
        %402 = vmatpush.bf16.msra.mxu0 0
        %403 = vmatpush.bf16.msra.mxu0 0
        %404 = vmatpush.bf16.msra.mxu0 0
        %405 = vmatpush.bf16.msra.mxu0 0
        %406 = vmatpush.bf16.msra.mxu0 %v397
        %407 = vmatmul.bf16.gmra.mxu0 %v369
        %v408 = vpop.f32.mrf.mxu0
        %v409 = vadd.f32 %v325, %v408
        %v410 = vpop.f32.mrf.mxu0
        %v411 = vadd.f32 %v325, %v410
        %412 = vmatmul.bf16.gmra.mxu0 %v372
        %v413 = vpop.f32.mrf.mxu0
        %v414 = vadd.f32 %v325, %v413
        %v415 = vpop.f32.mrf.mxu0
        %v416 = vadd.f32 %v325, %v415
        %417 = vmatmul.bf16.gmra.mxu0 %v375
        %v418 = vpop.f32.mrf.mxu0
        %v419 = vadd.f32 %v325, %v418
        %v420 = vpop.f32.mrf.mxu0
        %v421 = vadd.f32 %v325, %v420
        %422 = vmatmul.bf16.gmra.mxu0 %v378
        %v423 = vpop.f32.mrf.mxu0
        %v424 = vadd.f32 %v325, %v423
        %v425 = vpop.f32.mrf.mxu0
        %v426 = vadd.f32 %v325, %v425
        %427 = vmatmul.bf16.gmra.mxu0 %v381
        %v428 = vpop.f32.mrf.mxu0
        %v429 = vadd.f32 %v325, %v428
        %v430 = vpop.f32.mrf.mxu0
        %v431 = vadd.f32 %v325, %v430
        %432 = vmatmul.bf16.gmra.mxu0 %v384
        %v433 = vpop.f32.mrf.mxu0
        %v434 = vadd.f32 %v325, %v433
        %v435 = vpop.f32.mrf.mxu0
        %v436 = vadd.f32 %v325, %v435
        %437 = vmatmul.bf16.gmra.mxu0 %v387
        %v438 = vpop.f32.mrf.mxu0
        %v439 = vadd.f32 %v325, %v438
        %v440 = vpop.f32.mrf.mxu0
        %v441 = vadd.f32 %v325, %v440
        %442 = vmatmul.bf16.gmra.mxu0 %v390
        %v443 = vpop.f32.mrf.mxu0
        %v444 = vadd.f32 %v325, %v443
        %v445 = vpop.f32.mrf.mxu0
        %v446 = vadd.f32 %v325, %v445
        %447 = vdwg.mxu0
        %v448 = vmax.f32 %v409, 0.0
        %v449 = vmax.f32 %v411, 0.0
        %v450 = vmax.f32 %v414, 0.0
        %v451 = vmax.f32 %v416, 0.0
        %v452 = vmax.f32 %v419, 0.0
        %v453 = vmax.f32 %v421, 0.0
        %v454 = vmax.f32 %v424, 0.0
        %v455 = vmax.f32 %v426, 0.0
        %v456 = vmax.f32 %v429, 0.0
        %v457 = vmax.f32 %v431, 0.0
        %v458 = vmax.f32 %v434, 0.0
        %v459 = vmax.f32 %v436, 0.0
        %v460 = vmax.f32 %v439, 0.0
        %v461 = vmax.f32 %v441, 0.0
        %v462 = vmax.f32 %v444, 0.0
        %v463 = vmax.f32 %v446, 0.0
        %v464 = vpack.c.bf16 %v449, %v448
        %v465 = vpack.c.bf16 %v451, %v450
        %v466 = vpack.c.bf16 %v453, %v452
        %v467 = vpack.c.bf16 %v455, %v454
        %v468 = vpack.c.bf16 %v457, %v456
        %v469 = vpack.c.bf16 %v459, %v458
        %v470 = vpack.c.bf16 %v461, %v460
        %v471 = vpack.c.bf16 %v463, %v462
        %v472 = vld [vmem:[%s3] sm:$0xf]
        %v473 = vld [vmem:[%s3 + $0x4] sm:$0xf]
        %v474 = vld [vmem:[%s3 + $0x8] sm:$0xf]
        %v475 = vld [vmem:[%s3 + $0xc] sm:$0xf]
        %v476 = vld [vmem:[%s3 + $0x10] sm:$0xf]
        %v477 = vld [vmem:[%s3 + $0x14] sm:$0xf]
        %v478 = vld [vmem:[%s3 + $0x18] sm:$0xf]
        %v479 = vld [vmem:[%s3 + $0x1c] sm:$0xf]
        %v480 = vld [vmem:[%s4] sm:$0x1]
        %v482 = vperm.slane %v480, 0
        %v492 = vunpack.c.l.b16 %v472
        %v493 = vunpack.c.l.b16 %v473
        %v494 = vunpack.c.l.b16 %v474
        %v495 = vunpack.c.l.b16 %v475
        %v496 = vunpack.c.l.b16 %v476
        %v497 = vunpack.c.l.b16 %v477
        %v498 = vunpack.c.l.b16 %v478
        %v499 = vunpack.c.l.b16 %v479
        %v500 = vpack.c.b16 %v493, %v492
        %v501 = vpack.c.b16 %v495, %v494
        %v502 = vpack.c.b16 %v497, %v496
        %v503 = vpack.c.b16 %v499, %v498
        %vm508 = vcmask 523264
        %v510 = vsel %vm508, %v464, 0
        %v513 = vsel %vm508, %v465, 0
        %v516 = vsel %vm508, %v466, 0
        %v519 = vsel %vm508, %v467, 0
        %v522 = vsel %vm508, %v468, 0
        %v525 = vsel %vm508, %v469, 0
        %v528 = vsel %vm508, %v470, 0
        %v531 = vsel %vm508, %v471, 0
        %533 = vmatpush.bf16.msra.mxu0 0
        %534 = vmatpush.bf16.msra.mxu0 0
        %535 = vmatpush.bf16.msra.mxu0 0
        %536 = vmatpush.bf16.msra.mxu0 0
        %537 = vmatpush.bf16.msra.mxu0 %v503
        %538 = vmatpush.bf16.msra.mxu0 %v502
        %539 = vmatpush.bf16.msra.mxu0 %v501
        %540 = vmatpush.bf16.msra.mxu0 %v500
        %541 = vmatmul.bf16.gmra.mxu0 %v510
        %v542 = vpop.f32.mrf.mxu0
        %v543 = vadd.f32 %v482, %v542
        %v544 = vpop.f32.mrf.mxu0
        %v545 = vadd.f32 %v482, %v544
        %546 = vmatmul.bf16.gmra.mxu0 %v513
        %v547 = vpop.f32.mrf.mxu0
        %v548 = vadd.f32 %v482, %v547
        %v549 = vpop.f32.mrf.mxu0
        %v550 = vadd.f32 %v482, %v549
        %551 = vmatmul.bf16.gmra.mxu0 %v516
        %v552 = vpop.f32.mrf.mxu0
        %v553 = vadd.f32 %v482, %v552
        %v554 = vpop.f32.mrf.mxu0
        %v555 = vadd.f32 %v482, %v554
        %556 = vmatmul.bf16.gmra.mxu0 %v519
        %v557 = vpop.f32.mrf.mxu0
        %v558 = vadd.f32 %v482, %v557
        %v559 = vpop.f32.mrf.mxu0
        %v560 = vadd.f32 %v482, %v559
        %561 = vmatmul.bf16.gmra.mxu0 %v522
        %v562 = vpop.f32.mrf.mxu0
        %v563 = vadd.f32 %v482, %v562
        %v564 = vpop.f32.mrf.mxu0
        %v565 = vadd.f32 %v482, %v564
        %566 = vmatmul.bf16.gmra.mxu0 %v525
        %v567 = vpop.f32.mrf.mxu0
        %v568 = vadd.f32 %v482, %v567
        %v569 = vpop.f32.mrf.mxu0
        %v570 = vadd.f32 %v482, %v569
        %571 = vmatmul.bf16.gmra.mxu0 %v528
        %v572 = vpop.f32.mrf.mxu0
        %v573 = vadd.f32 %v482, %v572
        %v574 = vpop.f32.mrf.mxu0
        %v575 = vadd.f32 %v482, %v574
        %576 = vmatmul.bf16.gmra.mxu0 %v531
        %v577 = vpop.f32.mrf.mxu0
        %v578 = vadd.f32 %v482, %v577
        %v579 = vpop.f32.mrf.mxu0
        %v580 = vadd.f32 %v482, %v579
        %581 = vdwg.mxu0
        %v582 = vmax.f32 %v543, 0.0
        %v583 = vmax.f32 %v545, 0.0
        %v584 = vmax.f32 %v548, 0.0
        %v585 = vmax.f32 %v550, 0.0
        %v586 = vmax.f32 %v553, 0.0
        %v587 = vmax.f32 %v555, 0.0
        %v588 = vmax.f32 %v558, 0.0
        %v589 = vmax.f32 %v560, 0.0
        %v590 = vmax.f32 %v563, 0.0
        %v591 = vmax.f32 %v565, 0.0
        %v592 = vmax.f32 %v568, 0.0
        %v593 = vmax.f32 %v570, 0.0
        %v594 = vmax.f32 %v573, 0.0
        %v595 = vmax.f32 %v575, 0.0
        %v596 = vmax.f32 %v578, 0.0
        %v597 = vmax.f32 %v580, 0.0
        %v598 = vpack.c.bf16 %v583, %v582
        %v599 = vpack.c.bf16 %v585, %v584
        %v600 = vpack.c.bf16 %v587, %v586
        %v601 = vpack.c.bf16 %v589, %v588
        %v602 = vpack.c.bf16 %v591, %v590
        %v603 = vpack.c.bf16 %v593, %v592
        %v604 = vpack.c.bf16 %v595, %v594
        %v605 = vpack.c.bf16 %v597, %v596
        %v606 = vld [vmem:[%s5] sm:$0xff]
        %v607 = vld [vmem:[%s5 + $0x8] sm:$0xff]
        %v608 = vld [vmem:[%s5 + $0x10] sm:$0xff]
        %v609 = vld [vmem:[%s5 + $0x18] sm:$0xff]
        %v610 = vld [vmem:[%s5 + $0x20] sm:$0xff]
        %v611 = vld [vmem:[%s5 + $0x28] sm:$0xff]
        %v612 = vld [vmem:[%s5 + $0x30] sm:$0xff]
        %v613 = vld [vmem:[%s5 + $0x38] sm:$0xff]
        %v614 = vld [vmem:[%s5 + $0x40] sm:$0xff]
        %v615 = vld [vmem:[%s5 + $0x48] sm:$0xff]
        %v616 = vld [vmem:[%s5 + $0x50] sm:$0xff]
        %v617 = vld [vmem:[%s5 + $0x58] sm:$0xff]
        %v618 = vld [vmem:[%s5 + $0x60] sm:$0xff]
        %v619 = vld [vmem:[%s5 + $0x68] sm:$0xff]
        %v620 = vld [vmem:[%s5 + $0x70] sm:$0xff]
        %v621 = vld [vmem:[%s5 + $0x78] sm:$0xff]
        %v622 = vld [vmem:[%s5 + $0x80] sm:$0xff]
        %v623 = vld [vmem:[%s5 + $0x88] sm:$0xff]
        %v624 = vld [vmem:[%s5 + $0x90] sm:$0xff]
        %v625 = vld [vmem:[%s5 + $0x98] sm:$0xff]
        %v626 = vld [vmem:[%s5 + $0xa0] sm:$0xff]
        %v627 = vld [vmem:[%s5 + $0xa8] sm:$0xff]
        %v628 = vld [vmem:[%s5 + $0xb0] sm:$0xff]
        %v629 = vld [vmem:[%s5 + $0xb8] sm:$0xff]
        %v630 = vld [vmem:[%s5 + $0xc0] sm:$0xff]
        %v631 = vld [vmem:[%s5 + $0xc8] sm:$0xff]
        %v632 = vld [vmem:[%s5 + $0xd0] sm:$0xff]
        %v633 = vld [vmem:[%s5 + $0xd8] sm:$0xff]
        %v634 = vld [vmem:[%s5 + $0xe0] sm:$0xff]
        %v635 = vld [vmem:[%s5 + $0xe8] sm:$0xff]
        %v636 = vld [vmem:[%s5 + $0xf0] sm:$0xff]
        %v637 = vld [vmem:[%s5 + $0xf8] sm:$0xff]
        %v638 = vld [vmem:[%s5 + $0x100] sm:$0xff]
        %v639 = vld [vmem:[%s5 + $0x108] sm:$0xff]
        %v640 = vld [vmem:[%s5 + $0x110] sm:$0xff]
        %v641 = vld [vmem:[%s5 + $0x118] sm:$0xff]
        %v642 = vld [vmem:[%s5 + $0x120] sm:$0xff]
        %v643 = vld [vmem:[%s5 + $0x128] sm:$0xff]
        %v644 = vld [vmem:[%s5 + $0x130] sm:$0xff]
        %v645 = vld [vmem:[%s5 + $0x138] sm:$0xff]
        %v646 = vld [vmem:[%s5 + $0x140] sm:$0xff]
        %v647 = vld [vmem:[%s5 + $0x148] sm:$0xff]
        %v648 = vld [vmem:[%s5 + $0x150] sm:$0xff]
        %v649 = vld [vmem:[%s5 + $0x158] sm:$0xff]
        %v650 = vld [vmem:[%s5 + $0x160] sm:$0xff]
        %v651 = vld [vmem:[%s5 + $0x168] sm:$0xff]
        %v652 = vld [vmem:[%s5 + $0x170] sm:$0xff]
        %v653 = vld [vmem:[%s5 + $0x178] sm:$0xff]
        %v654 = vld [vmem:[%s5 + $0x180] sm:$0xff]
        %v655 = vld [vmem:[%s5 + $0x188] sm:$0xff]
        %v656 = vld [vmem:[%s5 + $0x190] sm:$0xff]
        %v657 = vld [vmem:[%s5 + $0x198] sm:$0xff]
        %v658 = vld [vmem:[%s5 + $0x1a0] sm:$0xff]
        %v659 = vld [vmem:[%s5 + $0x1a8] sm:$0xff]
        %v660 = vld [vmem:[%s5 + $0x1b0] sm:$0xff]
        %v661 = vld [vmem:[%s5 + $0x1b8] sm:$0xff]
        %v662 = vld [vmem:[%s5 + $0x1c0] sm:$0xff]
        %v663 = vld [vmem:[%s5 + $0x1c8] sm:$0xff]
        %v664 = vld [vmem:[%s5 + $0x1d0] sm:$0xff]
        %v665 = vld [vmem:[%s5 + $0x1d8] sm:$0xff]
        %v666 = vld [vmem:[%s5 + $0x1e0] sm:$0xff]
        %v667 = vld [vmem:[%s5 + $0x1e8] sm:$0xff]
        %v668 = vld [vmem:[%s5 + $0x1f0] sm:$0xff]
        %v669 = vld [vmem:[%s5 + $0x1f8] sm:$0xff]
        %v670 = vld [vmem:[%s6] sm:$0xff]
        %v672 = vperm.slane %v670, 0
        %v673 = vperm.slane %v670, 1
        %v674 = vperm.slane %v670, 2
        %v675 = vperm.slane %v670, 3
        %v676 = vperm.slane %v670, 4
        %v677 = vperm.slane %v670, 5
        %v678 = vperm.slane %v670, 6
        %v679 = vperm.slane %v670, 7
        %v752 = vunpack.c.l.b16 %v606
        %v753 = vunpack.c.h.b16 %v606
        %v754 = vunpack.c.l.b16 %v607
        %v755 = vunpack.c.h.b16 %v607
        %v756 = vunpack.c.l.b16 %v608
        %v757 = vunpack.c.h.b16 %v608
        %v758 = vunpack.c.l.b16 %v609
        %v759 = vunpack.c.h.b16 %v609
        %v760 = vunpack.c.l.b16 %v610
        %v761 = vunpack.c.h.b16 %v610
        %v762 = vunpack.c.l.b16 %v611
        %v763 = vunpack.c.h.b16 %v611
        %v764 = vunpack.c.l.b16 %v612
        %v765 = vunpack.c.h.b16 %v612
        %v766 = vunpack.c.l.b16 %v613
        %v767 = vunpack.c.h.b16 %v613
        %v768 = vunpack.c.l.b16 %v614
        %v769 = vunpack.c.h.b16 %v614
        %v770 = vunpack.c.l.b16 %v615
        %v771 = vunpack.c.h.b16 %v615
        %v772 = vunpack.c.l.b16 %v616
        %v773 = vunpack.c.h.b16 %v616
        %v774 = vunpack.c.l.b16 %v617
        %v775 = vunpack.c.h.b16 %v617
        %v776 = vunpack.c.l.b16 %v618
        %v777 = vunpack.c.h.b16 %v618
        %v778 = vunpack.c.l.b16 %v619
        %v779 = vunpack.c.h.b16 %v619
        %v780 = vunpack.c.l.b16 %v620
        %v781 = vunpack.c.h.b16 %v620
        %v782 = vunpack.c.l.b16 %v621
        %v783 = vunpack.c.h.b16 %v621
        %v784 = vunpack.c.l.b16 %v622
        %v785 = vunpack.c.h.b16 %v622
        %v786 = vunpack.c.l.b16 %v623
        %v787 = vunpack.c.h.b16 %v623
        %v788 = vunpack.c.l.b16 %v624
        %v789 = vunpack.c.h.b16 %v624
        %v790 = vunpack.c.l.b16 %v625
        %v791 = vunpack.c.h.b16 %v625
        %v792 = vunpack.c.l.b16 %v626
        %v793 = vunpack.c.h.b16 %v626
        %v794 = vunpack.c.l.b16 %v627
        %v795 = vunpack.c.h.b16 %v627
        %v796 = vunpack.c.l.b16 %v628
        %v797 = vunpack.c.h.b16 %v628
        %v798 = vunpack.c.l.b16 %v629
        %v799 = vunpack.c.h.b16 %v629
        %v800 = vunpack.c.l.b16 %v630
        %v801 = vunpack.c.h.b16 %v630
        %v802 = vunpack.c.l.b16 %v631
        %v803 = vunpack.c.h.b16 %v631
        %v804 = vunpack.c.l.b16 %v632
        %v805 = vunpack.c.h.b16 %v632
        %v806 = vunpack.c.l.b16 %v633
        %v807 = vunpack.c.h.b16 %v633
        %v808 = vunpack.c.l.b16 %v634
        %v809 = vunpack.c.h.b16 %v634
        %v810 = vunpack.c.l.b16 %v635
        %v811 = vunpack.c.h.b16 %v635
        %v812 = vunpack.c.l.b16 %v636
        %v813 = vunpack.c.h.b16 %v636
        %v814 = vunpack.c.l.b16 %v637
        %v815 = vunpack.c.h.b16 %v637
        %v816 = vunpack.c.l.b16 %v638
        %v817 = vunpack.c.h.b16 %v638
        %v818 = vunpack.c.l.b16 %v639
        %v819 = vunpack.c.h.b16 %v639
        %v820 = vunpack.c.l.b16 %v640
        %v821 = vunpack.c.h.b16 %v640
        %v822 = vunpack.c.l.b16 %v641
        %v823 = vunpack.c.h.b16 %v641
        %v824 = vunpack.c.l.b16 %v642
        %v825 = vunpack.c.h.b16 %v642
        %v826 = vunpack.c.l.b16 %v643
        %v827 = vunpack.c.h.b16 %v643
        %v828 = vunpack.c.l.b16 %v644
        %v829 = vunpack.c.h.b16 %v644
        %v830 = vunpack.c.l.b16 %v645
        %v831 = vunpack.c.h.b16 %v645
        %v832 = vunpack.c.l.b16 %v646
        %v833 = vunpack.c.h.b16 %v646
        %v834 = vunpack.c.l.b16 %v647
        %v835 = vunpack.c.h.b16 %v647
        %v836 = vunpack.c.l.b16 %v648
        %v837 = vunpack.c.h.b16 %v648
        %v838 = vunpack.c.l.b16 %v649
        %v839 = vunpack.c.h.b16 %v649
        %v840 = vunpack.c.l.b16 %v650
        %v841 = vunpack.c.h.b16 %v650
        %v842 = vunpack.c.l.b16 %v651
        %v843 = vunpack.c.h.b16 %v651
        %v844 = vunpack.c.l.b16 %v652
        %v845 = vunpack.c.h.b16 %v652
        %v846 = vunpack.c.l.b16 %v653
        %v847 = vunpack.c.h.b16 %v653
        %v848 = vunpack.c.l.b16 %v654
        %v849 = vunpack.c.h.b16 %v654
        %v850 = vunpack.c.l.b16 %v655
        %v851 = vunpack.c.h.b16 %v655
        %v852 = vunpack.c.l.b16 %v656
        %v853 = vunpack.c.h.b16 %v656
        %v854 = vunpack.c.l.b16 %v657
        %v855 = vunpack.c.h.b16 %v657
        %v856 = vunpack.c.l.b16 %v658
        %v857 = vunpack.c.h.b16 %v658
        %v858 = vunpack.c.l.b16 %v659
        %v859 = vunpack.c.h.b16 %v659
        %v860 = vunpack.c.l.b16 %v660
        %v861 = vunpack.c.h.b16 %v660
        %v862 = vunpack.c.l.b16 %v661
        %v863 = vunpack.c.h.b16 %v661
        %v864 = vunpack.c.l.b16 %v662
        %v865 = vunpack.c.h.b16 %v662
        %v866 = vunpack.c.l.b16 %v663
        %v867 = vunpack.c.h.b16 %v663
        %v868 = vunpack.c.l.b16 %v664
        %v869 = vunpack.c.h.b16 %v664
        %v870 = vunpack.c.l.b16 %v665
        %v871 = vunpack.c.h.b16 %v665
        %v872 = vunpack.c.l.b16 %v666
        %v873 = vunpack.c.h.b16 %v666
        %v874 = vunpack.c.l.b16 %v667
        %v875 = vunpack.c.h.b16 %v667
        %v876 = vunpack.c.l.b16 %v668
        %v877 = vunpack.c.h.b16 %v668
        %v878 = vunpack.c.l.b16 %v669
        %v879 = vunpack.c.h.b16 %v669
        %v880 = vpack.c.b16 %v760, %v752
        %v881 = vpack.c.b16 %v761, %v753
        %v882 = vpack.c.b16 %v762, %v754
        %v883 = vpack.c.b16 %v763, %v755
        %v884 = vpack.c.b16 %v764, %v756
        %v885 = vpack.c.b16 %v765, %v757
        %v886 = vpack.c.b16 %v766, %v758
        %v887 = vpack.c.b16 %v767, %v759
        %v888 = vpack.c.b16 %v776, %v768
        %v889 = vpack.c.b16 %v777, %v769
        %v890 = vpack.c.b16 %v778, %v770
        %v891 = vpack.c.b16 %v779, %v771
        %v892 = vpack.c.b16 %v780, %v772
        %v893 = vpack.c.b16 %v781, %v773
        %v894 = vpack.c.b16 %v782, %v774
        %v895 = vpack.c.b16 %v783, %v775
        %v896 = vpack.c.b16 %v792, %v784
        %v897 = vpack.c.b16 %v793, %v785
        %v898 = vpack.c.b16 %v794, %v786
        %v899 = vpack.c.b16 %v795, %v787
        %v900 = vpack.c.b16 %v796, %v788
        %v901 = vpack.c.b16 %v797, %v789
        %v902 = vpack.c.b16 %v798, %v790
        %v903 = vpack.c.b16 %v799, %v791
        %v904 = vpack.c.b16 %v808, %v800
        %v905 = vpack.c.b16 %v809, %v801
        %v906 = vpack.c.b16 %v810, %v802
        %v907 = vpack.c.b16 %v811, %v803
        %v908 = vpack.c.b16 %v812, %v804
        %v909 = vpack.c.b16 %v813, %v805
        %v910 = vpack.c.b16 %v814, %v806
        %v911 = vpack.c.b16 %v815, %v807
        %v912 = vpack.c.b16 %v824, %v816
        %v913 = vpack.c.b16 %v825, %v817
        %v914 = vpack.c.b16 %v826, %v818
        %v915 = vpack.c.b16 %v827, %v819
        %v916 = vpack.c.b16 %v828, %v820
        %v917 = vpack.c.b16 %v829, %v821
        %v918 = vpack.c.b16 %v830, %v822
        %v919 = vpack.c.b16 %v831, %v823
        %v920 = vpack.c.b16 %v840, %v832
        %v921 = vpack.c.b16 %v841, %v833
        %v922 = vpack.c.b16 %v842, %v834
        %v923 = vpack.c.b16 %v843, %v835
        %v924 = vpack.c.b16 %v844, %v836
        %v925 = vpack.c.b16 %v845, %v837
        %v926 = vpack.c.b16 %v846, %v838
        %v927 = vpack.c.b16 %v847, %v839
        %v928 = vpack.c.b16 %v856, %v848
        %v929 = vpack.c.b16 %v857, %v849
        %v930 = vpack.c.b16 %v858, %v850
        %v931 = vpack.c.b16 %v859, %v851
        %v932 = vpack.c.b16 %v860, %v852
        %v933 = vpack.c.b16 %v861, %v853
        %v934 = vpack.c.b16 %v862, %v854
        %v935 = vpack.c.b16 %v863, %v855
        %v936 = vpack.c.b16 %v872, %v864
        %v937 = vpack.c.b16 %v873, %v865
        %v938 = vpack.c.b16 %v874, %v866
        %v939 = vpack.c.b16 %v875, %v867
        %v940 = vpack.c.b16 %v876, %v868
        %v941 = vpack.c.b16 %v877, %v869
        %v942 = vpack.c.b16 %v878, %v870
        %v943 = vpack.c.b16 %v879, %v871
        %1008 = vmatpush.bf16.msra.mxu0 %v936
        %1009 = vmatpush.bf16.msra.mxu0 %v928
        %1010 = vmatpush.bf16.msra.mxu0 %v920
        %1011 = vmatpush.bf16.msra.mxu0 %v912
        %1012 = vmatpush.bf16.msra.mxu0 %v904
        %1013 = vmatpush.bf16.msra.mxu0 %v896
        %1014 = vmatpush.bf16.msra.mxu0 %v888
        %1015 = vmatpush.bf16.msra.mxu0 %v880
        %1016 = vmatmul.bf16.gmra.mxu0 %v598
        %v1017 = vpop.f32.mrf.mxu0
        %v1018 = vadd.f32 %v672, %v1017
        %v1019 = vpop.f32.mrf.mxu0
        %v1020 = vadd.f32 %v672, %v1019
        %1021 = vmatmul.bf16.gmra.mxu0 %v599
        %v1022 = vpop.f32.mrf.mxu0
        %v1023 = vadd.f32 %v672, %v1022
        %v1024 = vpop.f32.mrf.mxu0
        %v1025 = vadd.f32 %v672, %v1024
        %1026 = vmatmul.bf16.gmra.mxu0 %v600
        %v1027 = vpop.f32.mrf.mxu0
        %v1028 = vadd.f32 %v672, %v1027
        %v1029 = vpop.f32.mrf.mxu0
        %v1030 = vadd.f32 %v672, %v1029
        %1031 = vmatmul.bf16.gmra.mxu0 %v601
        %v1032 = vpop.f32.mrf.mxu0
        %v1033 = vadd.f32 %v672, %v1032
        %v1034 = vpop.f32.mrf.mxu0
        %v1035 = vadd.f32 %v672, %v1034
        %1036 = vmatmul.bf16.gmra.mxu0 %v602
        %v1037 = vpop.f32.mrf.mxu0
        %v1038 = vadd.f32 %v672, %v1037
        %v1039 = vpop.f32.mrf.mxu0
        %v1040 = vadd.f32 %v672, %v1039
        %1041 = vmatmul.bf16.gmra.mxu0 %v603
        %v1042 = vpop.f32.mrf.mxu0
        %v1043 = vadd.f32 %v672, %v1042
        %v1044 = vpop.f32.mrf.mxu0
        %v1045 = vadd.f32 %v672, %v1044
        %1046 = vmatmul.bf16.gmra.mxu0 %v604
        %v1047 = vpop.f32.mrf.mxu0
        %v1048 = vadd.f32 %v672, %v1047
        %v1049 = vpop.f32.mrf.mxu0
        %v1050 = vadd.f32 %v672, %v1049
        %1051 = vmatmul.bf16.gmra.mxu0 %v605
        %v1052 = vpop.f32.mrf.mxu0
        %v1053 = vadd.f32 %v672, %v1052
        %v1054 = vpop.f32.mrf.mxu0
        %v1055 = vadd.f32 %v672, %v1054
        %1056 = vdwg.mxu0
        %1057 = vmatpush.bf16.msra.mxu0 %v937
        %1058 = vmatpush.bf16.msra.mxu0 %v929
        %1059 = vmatpush.bf16.msra.mxu0 %v921
        %1060 = vmatpush.bf16.msra.mxu0 %v913
        %1061 = vmatpush.bf16.msra.mxu0 %v905
        %1062 = vmatpush.bf16.msra.mxu0 %v897
        %1063 = vmatpush.bf16.msra.mxu0 %v889
        %1064 = vmatpush.bf16.msra.mxu0 %v881
        %1065 = vmatmul.bf16.gmra.mxu0 %v598
        %v1066 = vpop.f32.mrf.mxu0
        %v1067 = vadd.f32 %v673, %v1066
        %v1068 = vpop.f32.mrf.mxu0
        %v1069 = vadd.f32 %v673, %v1068
        %1070 = vmatmul.bf16.gmra.mxu0 %v599
        %v1071 = vpop.f32.mrf.mxu0
        %v1072 = vadd.f32 %v673, %v1071
        %v1073 = vpop.f32.mrf.mxu0
        %v1074 = vadd.f32 %v673, %v1073
        %1075 = vmatmul.bf16.gmra.mxu0 %v600
        %v1076 = vpop.f32.mrf.mxu0
        %v1077 = vadd.f32 %v673, %v1076
        %v1078 = vpop.f32.mrf.mxu0
        %v1079 = vadd.f32 %v673, %v1078
        %1080 = vmatmul.bf16.gmra.mxu0 %v601
        %v1081 = vpop.f32.mrf.mxu0
        %v1082 = vadd.f32 %v673, %v1081
        %v1083 = vpop.f32.mrf.mxu0
        %v1084 = vadd.f32 %v673, %v1083
        %1085 = vmatmul.bf16.gmra.mxu0 %v602
        %v1086 = vpop.f32.mrf.mxu0
        %v1087 = vadd.f32 %v673, %v1086
        %v1088 = vpop.f32.mrf.mxu0
        %v1089 = vadd.f32 %v673, %v1088
        %1090 = vmatmul.bf16.gmra.mxu0 %v603
        %v1091 = vpop.f32.mrf.mxu0
        %v1092 = vadd.f32 %v673, %v1091
        %v1093 = vpop.f32.mrf.mxu0
        %v1094 = vadd.f32 %v673, %v1093
        %1095 = vmatmul.bf16.gmra.mxu0 %v604
        %v1096 = vpop.f32.mrf.mxu0
        %v1097 = vadd.f32 %v673, %v1096
        %v1098 = vpop.f32.mrf.mxu0
        %v1099 = vadd.f32 %v673, %v1098
        %1100 = vmatmul.bf16.gmra.mxu0 %v605
        %v1101 = vpop.f32.mrf.mxu0
        %v1102 = vadd.f32 %v673, %v1101
        %v1103 = vpop.f32.mrf.mxu0
        %v1104 = vadd.f32 %v673, %v1103
        %1105 = vdwg.mxu0
        %1106 = vmatpush.bf16.msra.mxu0 %v938
        %1107 = vmatpush.bf16.msra.mxu0 %v930
        %1108 = vmatpush.bf16.msra.mxu0 %v922
        %1109 = vmatpush.bf16.msra.mxu0 %v914
        %1110 = vmatpush.bf16.msra.mxu0 %v906
        %1111 = vmatpush.bf16.msra.mxu0 %v898
        %1112 = vmatpush.bf16.msra.mxu0 %v890
        %1113 = vmatpush.bf16.msra.mxu0 %v882
        %1114 = vmatmul.bf16.gmra.mxu0 %v598
        %v1115 = vpop.f32.mrf.mxu0
        %v1116 = vadd.f32 %v674, %v1115
        %v1117 = vpop.f32.mrf.mxu0
        %v1118 = vadd.f32 %v674, %v1117
        %1119 = vmatmul.bf16.gmra.mxu0 %v599
        %v1120 = vpop.f32.mrf.mxu0
        %v1121 = vadd.f32 %v674, %v1120
        %v1122 = vpop.f32.mrf.mxu0
        %v1123 = vadd.f32 %v674, %v1122
        %1124 = vmatmul.bf16.gmra.mxu0 %v600
        %v1125 = vpop.f32.mrf.mxu0
        %v1126 = vadd.f32 %v674, %v1125
        %v1127 = vpop.f32.mrf.mxu0
        %v1128 = vadd.f32 %v674, %v1127
        %1129 = vmatmul.bf16.gmra.mxu0 %v601
        %v1130 = vpop.f32.mrf.mxu0
        %v1131 = vadd.f32 %v674, %v1130
        %v1132 = vpop.f32.mrf.mxu0
        %v1133 = vadd.f32 %v674, %v1132
        %1134 = vmatmul.bf16.gmra.mxu0 %v602
        %v1135 = vpop.f32.mrf.mxu0
        %v1136 = vadd.f32 %v674, %v1135
        %v1137 = vpop.f32.mrf.mxu0
        %v1138 = vadd.f32 %v674, %v1137
        %1139 = vmatmul.bf16.gmra.mxu0 %v603
        %v1140 = vpop.f32.mrf.mxu0
        %v1141 = vadd.f32 %v674, %v1140
        %v1142 = vpop.f32.mrf.mxu0
        %v1143 = vadd.f32 %v674, %v1142
        %1144 = vmatmul.bf16.gmra.mxu0 %v604
        %v1145 = vpop.f32.mrf.mxu0
        %v1146 = vadd.f32 %v674, %v1145
        %v1147 = vpop.f32.mrf.mxu0
        %v1148 = vadd.f32 %v674, %v1147
        %1149 = vmatmul.bf16.gmra.mxu0 %v605
        %v1150 = vpop.f32.mrf.mxu0
        %v1151 = vadd.f32 %v674, %v1150
        %v1152 = vpop.f32.mrf.mxu0
        %v1153 = vadd.f32 %v674, %v1152
        %1154 = vdwg.mxu0
        %1155 = vmatpush.bf16.msra.mxu0 %v939
        %1156 = vmatpush.bf16.msra.mxu0 %v931
        %1157 = vmatpush.bf16.msra.mxu0 %v923
        %1158 = vmatpush.bf16.msra.mxu0 %v915
        %1159 = vmatpush.bf16.msra.mxu0 %v907
        %1160 = vmatpush.bf16.msra.mxu0 %v899
        %1161 = vmatpush.bf16.msra.mxu0 %v891
        %1162 = vmatpush.bf16.msra.mxu0 %v883
        %1163 = vmatmul.bf16.gmra.mxu0 %v598
        %v1164 = vpop.f32.mrf.mxu0
        %v1165 = vadd.f32 %v675, %v1164
        %v1166 = vpop.f32.mrf.mxu0
        %v1167 = vadd.f32 %v675, %v1166
        %1168 = vmatmul.bf16.gmra.mxu0 %v599
        %v1169 = vpop.f32.mrf.mxu0
        %v1170 = vadd.f32 %v675, %v1169
        %v1171 = vpop.f32.mrf.mxu0
        %v1172 = vadd.f32 %v675, %v1171
        %1173 = vmatmul.bf16.gmra.mxu0 %v600
        %v1174 = vpop.f32.mrf.mxu0
        %v1175 = vadd.f32 %v675, %v1174
        %v1176 = vpop.f32.mrf.mxu0
        %v1177 = vadd.f32 %v675, %v1176
        %1178 = vmatmul.bf16.gmra.mxu0 %v601
        %v1179 = vpop.f32.mrf.mxu0
        %v1180 = vadd.f32 %v675, %v1179
        %v1181 = vpop.f32.mrf.mxu0
        %v1182 = vadd.f32 %v675, %v1181
        %1183 = vmatmul.bf16.gmra.mxu0 %v602
        %v1184 = vpop.f32.mrf.mxu0
        %v1185 = vadd.f32 %v675, %v1184
        %v1186 = vpop.f32.mrf.mxu0
        %v1187 = vadd.f32 %v675, %v1186
        %1188 = vmatmul.bf16.gmra.mxu0 %v603
        %v1189 = vpop.f32.mrf.mxu0
        %v1190 = vadd.f32 %v675, %v1189
        %v1191 = vpop.f32.mrf.mxu0
        %v1192 = vadd.f32 %v675, %v1191
        %1193 = vmatmul.bf16.gmra.mxu0 %v604
        %v1194 = vpop.f32.mrf.mxu0
        %v1195 = vadd.f32 %v675, %v1194
        %v1196 = vpop.f32.mrf.mxu0
        %v1197 = vadd.f32 %v675, %v1196
        %1198 = vmatmul.bf16.gmra.mxu0 %v605
        %v1199 = vpop.f32.mrf.mxu0
        %v1200 = vadd.f32 %v675, %v1199
        %v1201 = vpop.f32.mrf.mxu0
        %v1202 = vadd.f32 %v675, %v1201
        %1203 = vdwg.mxu0
        %1204 = vmatpush.bf16.msra.mxu0 %v940
        %1205 = vmatpush.bf16.msra.mxu0 %v932
        %1206 = vmatpush.bf16.msra.mxu0 %v924
        %1207 = vmatpush.bf16.msra.mxu0 %v916
        %1208 = vmatpush.bf16.msra.mxu0 %v908
        %1209 = vmatpush.bf16.msra.mxu0 %v900
        %1210 = vmatpush.bf16.msra.mxu0 %v892
        %1211 = vmatpush.bf16.msra.mxu0 %v884
        %1212 = vmatmul.bf16.gmra.mxu0 %v598
        %v1213 = vpop.f32.mrf.mxu0
        %v1214 = vadd.f32 %v676, %v1213
        %v1215 = vpop.f32.mrf.mxu0
        %v1216 = vadd.f32 %v676, %v1215
        %1217 = vmatmul.bf16.gmra.mxu0 %v599
        %v1218 = vpop.f32.mrf.mxu0
        %v1219 = vadd.f32 %v676, %v1218
        %v1220 = vpop.f32.mrf.mxu0
        %v1221 = vadd.f32 %v676, %v1220
        %1222 = vmatmul.bf16.gmra.mxu0 %v600
        %v1223 = vpop.f32.mrf.mxu0
        %v1224 = vadd.f32 %v676, %v1223
        %v1225 = vpop.f32.mrf.mxu0
        %v1226 = vadd.f32 %v676, %v1225
        %1227 = vmatmul.bf16.gmra.mxu0 %v601
        %v1228 = vpop.f32.mrf.mxu0
        %v1229 = vadd.f32 %v676, %v1228
        %v1230 = vpop.f32.mrf.mxu0
        %v1231 = vadd.f32 %v676, %v1230
        %1232 = vmatmul.bf16.gmra.mxu0 %v602
        %v1233 = vpop.f32.mrf.mxu0
        %v1234 = vadd.f32 %v676, %v1233
        %v1235 = vpop.f32.mrf.mxu0
        %v1236 = vadd.f32 %v676, %v1235
        %1237 = vmatmul.bf16.gmra.mxu0 %v603
        %v1238 = vpop.f32.mrf.mxu0
        %v1239 = vadd.f32 %v676, %v1238
        %v1240 = vpop.f32.mrf.mxu0
        %v1241 = vadd.f32 %v676, %v1240
        %1242 = vmatmul.bf16.gmra.mxu0 %v604
        %v1243 = vpop.f32.mrf.mxu0
        %v1244 = vadd.f32 %v676, %v1243
        %v1245 = vpop.f32.mrf.mxu0
        %v1246 = vadd.f32 %v676, %v1245
        %1247 = vmatmul.bf16.gmra.mxu0 %v605
        %v1248 = vpop.f32.mrf.mxu0
        %v1249 = vadd.f32 %v676, %v1248
        %v1250 = vpop.f32.mrf.mxu0
        %v1251 = vadd.f32 %v676, %v1250
        %1252 = vdwg.mxu0
        %1253 = vmatpush.bf16.msra.mxu0 %v941
        %1254 = vmatpush.bf16.msra.mxu0 %v933
        %1255 = vmatpush.bf16.msra.mxu0 %v925
        %1256 = vmatpush.bf16.msra.mxu0 %v917
        %1257 = vmatpush.bf16.msra.mxu0 %v909
        %1258 = vmatpush.bf16.msra.mxu0 %v901
        %1259 = vmatpush.bf16.msra.mxu0 %v893
        %1260 = vmatpush.bf16.msra.mxu0 %v885
        %1261 = vmatmul.bf16.gmra.mxu0 %v598
        %v1262 = vpop.f32.mrf.mxu0
        %v1263 = vadd.f32 %v677, %v1262
        %v1264 = vpop.f32.mrf.mxu0
        %v1265 = vadd.f32 %v677, %v1264
        %1266 = vmatmul.bf16.gmra.mxu0 %v599
        %v1267 = vpop.f32.mrf.mxu0
        %v1268 = vadd.f32 %v677, %v1267
        %v1269 = vpop.f32.mrf.mxu0
        %v1270 = vadd.f32 %v677, %v1269
        %1271 = vmatmul.bf16.gmra.mxu0 %v600
        %v1272 = vpop.f32.mrf.mxu0
        %v1273 = vadd.f32 %v677, %v1272
        %v1274 = vpop.f32.mrf.mxu0
        %v1275 = vadd.f32 %v677, %v1274
        %1276 = vmatmul.bf16.gmra.mxu0 %v601
        %v1277 = vpop.f32.mrf.mxu0
        %v1278 = vadd.f32 %v677, %v1277
        %v1279 = vpop.f32.mrf.mxu0
        %v1280 = vadd.f32 %v677, %v1279
        %1281 = vmatmul.bf16.gmra.mxu0 %v602
        %v1282 = vpop.f32.mrf.mxu0
        %v1283 = vadd.f32 %v677, %v1282
        %v1284 = vpop.f32.mrf.mxu0
        %v1285 = vadd.f32 %v677, %v1284
        %1286 = vmatmul.bf16.gmra.mxu0 %v603
        %v1287 = vpop.f32.mrf.mxu0
        %v1288 = vadd.f32 %v677, %v1287
        %v1289 = vpop.f32.mrf.mxu0
        %v1290 = vadd.f32 %v677, %v1289
        %1291 = vmatmul.bf16.gmra.mxu0 %v604
        %v1292 = vpop.f32.mrf.mxu0
        %v1293 = vadd.f32 %v677, %v1292
        %v1294 = vpop.f32.mrf.mxu0
        %v1295 = vadd.f32 %v677, %v1294
        %1296 = vmatmul.bf16.gmra.mxu0 %v605
        %v1297 = vpop.f32.mrf.mxu0
        %v1298 = vadd.f32 %v677, %v1297
        %v1299 = vpop.f32.mrf.mxu0
        %v1300 = vadd.f32 %v677, %v1299
        %1301 = vdwg.mxu0
        %1302 = vmatpush.bf16.msra.mxu0 %v942
        %1303 = vmatpush.bf16.msra.mxu0 %v934
        %1304 = vmatpush.bf16.msra.mxu0 %v926
        %1305 = vmatpush.bf16.msra.mxu0 %v918
        %1306 = vmatpush.bf16.msra.mxu0 %v910
        %1307 = vmatpush.bf16.msra.mxu0 %v902
        %1308 = vmatpush.bf16.msra.mxu0 %v894
        %1309 = vmatpush.bf16.msra.mxu0 %v886
        %1310 = vmatmul.bf16.gmra.mxu0 %v598
        %v1311 = vpop.f32.mrf.mxu0
        %v1312 = vadd.f32 %v678, %v1311
        %v1313 = vpop.f32.mrf.mxu0
        %v1314 = vadd.f32 %v678, %v1313
        %1315 = vmatmul.bf16.gmra.mxu0 %v599
        %v1316 = vpop.f32.mrf.mxu0
        %v1317 = vadd.f32 %v678, %v1316
        %v1318 = vpop.f32.mrf.mxu0
        %v1319 = vadd.f32 %v678, %v1318
        %1320 = vmatmul.bf16.gmra.mxu0 %v600
        %v1321 = vpop.f32.mrf.mxu0
        %v1322 = vadd.f32 %v678, %v1321
        %v1323 = vpop.f32.mrf.mxu0
        %v1324 = vadd.f32 %v678, %v1323
        %1325 = vmatmul.bf16.gmra.mxu0 %v601
        %v1326 = vpop.f32.mrf.mxu0
        %v1327 = vadd.f32 %v678, %v1326
        %v1328 = vpop.f32.mrf.mxu0
        %v1329 = vadd.f32 %v678, %v1328
        %1330 = vmatmul.bf16.gmra.mxu0 %v602
        %v1331 = vpop.f32.mrf.mxu0
        %v1332 = vadd.f32 %v678, %v1331
        %v1333 = vpop.f32.mrf.mxu0
        %v1334 = vadd.f32 %v678, %v1333
        %1335 = vmatmul.bf16.gmra.mxu0 %v603
        %v1336 = vpop.f32.mrf.mxu0
        %v1337 = vadd.f32 %v678, %v1336
        %v1338 = vpop.f32.mrf.mxu0
        %v1339 = vadd.f32 %v678, %v1338
        %1340 = vmatmul.bf16.gmra.mxu0 %v604
        %v1341 = vpop.f32.mrf.mxu0
        %v1342 = vadd.f32 %v678, %v1341
        %v1343 = vpop.f32.mrf.mxu0
        %v1344 = vadd.f32 %v678, %v1343
        %1345 = vmatmul.bf16.gmra.mxu0 %v605
        %v1346 = vpop.f32.mrf.mxu0
        %v1347 = vadd.f32 %v678, %v1346
        %v1348 = vpop.f32.mrf.mxu0
        %v1349 = vadd.f32 %v678, %v1348
        %1350 = vdwg.mxu0
        %1351 = vmatpush.bf16.msra.mxu0 %v943
        %1352 = vmatpush.bf16.msra.mxu0 %v935
        %1353 = vmatpush.bf16.msra.mxu0 %v927
        %1354 = vmatpush.bf16.msra.mxu0 %v919
        %1355 = vmatpush.bf16.msra.mxu0 %v911
        %1356 = vmatpush.bf16.msra.mxu0 %v903
        %1357 = vmatpush.bf16.msra.mxu0 %v895
        %1358 = vmatpush.bf16.msra.mxu0 %v887
        %1359 = vmatmul.bf16.gmra.mxu0 %v598
        %v1360 = vpop.f32.mrf.mxu0
        %v1361 = vadd.f32 %v679, %v1360
        %v1362 = vpop.f32.mrf.mxu0
        %v1363 = vadd.f32 %v679, %v1362
        %1364 = vmatmul.bf16.gmra.mxu0 %v599
        %v1365 = vpop.f32.mrf.mxu0
        %v1366 = vadd.f32 %v679, %v1365
        %v1367 = vpop.f32.mrf.mxu0
        %v1368 = vadd.f32 %v679, %v1367
        %1369 = vmatmul.bf16.gmra.mxu0 %v600
        %v1370 = vpop.f32.mrf.mxu0
        %v1371 = vadd.f32 %v679, %v1370
        %v1372 = vpop.f32.mrf.mxu0
        %v1373 = vadd.f32 %v679, %v1372
        %1374 = vmatmul.bf16.gmra.mxu0 %v601
        %v1375 = vpop.f32.mrf.mxu0
        %v1376 = vadd.f32 %v679, %v1375
        %v1377 = vpop.f32.mrf.mxu0
        %v1378 = vadd.f32 %v679, %v1377
        %1379 = vmatmul.bf16.gmra.mxu0 %v602
        %v1380 = vpop.f32.mrf.mxu0
        %v1381 = vadd.f32 %v679, %v1380
        %v1382 = vpop.f32.mrf.mxu0
        %v1383 = vadd.f32 %v679, %v1382
        %1384 = vmatmul.bf16.gmra.mxu0 %v603
        %v1385 = vpop.f32.mrf.mxu0
        %v1386 = vadd.f32 %v679, %v1385
        %v1387 = vpop.f32.mrf.mxu0
        %v1388 = vadd.f32 %v679, %v1387
        %1389 = vmatmul.bf16.gmra.mxu0 %v604
        %v1390 = vpop.f32.mrf.mxu0
        %v1391 = vadd.f32 %v679, %v1390
        %v1392 = vpop.f32.mrf.mxu0
        %v1393 = vadd.f32 %v679, %v1392
        %1394 = vmatmul.bf16.gmra.mxu0 %v605
        %v1395 = vpop.f32.mrf.mxu0
        %v1396 = vadd.f32 %v679, %v1395
        %v1397 = vpop.f32.mrf.mxu0
        %v1398 = vadd.f32 %v679, %v1397
        %1399 = vdwg.mxu0
        %v1400 = vmax.f32 %v1018, 0.0
        %v1401 = vmax.f32 %v1067, 0.0
        %v1402 = vmax.f32 %v1116, 0.0
        %v1403 = vmax.f32 %v1165, 0.0
        %v1404 = vmax.f32 %v1214, 0.0
        %v1405 = vmax.f32 %v1263, 0.0
        %v1406 = vmax.f32 %v1312, 0.0
        %v1407 = vmax.f32 %v1361, 0.0
        %v1408 = vmax.f32 %v1020, 0.0
        %v1409 = vmax.f32 %v1069, 0.0
        %v1410 = vmax.f32 %v1118, 0.0
        %v1411 = vmax.f32 %v1167, 0.0
        %v1412 = vmax.f32 %v1216, 0.0
        %v1413 = vmax.f32 %v1265, 0.0
        %v1414 = vmax.f32 %v1314, 0.0
        %v1415 = vmax.f32 %v1363, 0.0
        %v1416 = vmax.f32 %v1023, 0.0
        %v1417 = vmax.f32 %v1072, 0.0
        %v1418 = vmax.f32 %v1121, 0.0
        %v1419 = vmax.f32 %v1170, 0.0
        %v1420 = vmax.f32 %v1219, 0.0
        %v1421 = vmax.f32 %v1268, 0.0
        %v1422 = vmax.f32 %v1317, 0.0
        %v1423 = vmax.f32 %v1366, 0.0
        %v1424 = vmax.f32 %v1025, 0.0
        %v1425 = vmax.f32 %v1074, 0.0
        %v1426 = vmax.f32 %v1123, 0.0
        %v1427 = vmax.f32 %v1172, 0.0
        %v1428 = vmax.f32 %v1221, 0.0
        %v1429 = vmax.f32 %v1270, 0.0
        %v1430 = vmax.f32 %v1319, 0.0
        %v1431 = vmax.f32 %v1368, 0.0
        %v1432 = vmax.f32 %v1028, 0.0
        %v1433 = vmax.f32 %v1077, 0.0
        %v1434 = vmax.f32 %v1126, 0.0
        %v1435 = vmax.f32 %v1175, 0.0
        %v1436 = vmax.f32 %v1224, 0.0
        %v1437 = vmax.f32 %v1273, 0.0
        %v1438 = vmax.f32 %v1322, 0.0
        %v1439 = vmax.f32 %v1371, 0.0
        %v1440 = vmax.f32 %v1030, 0.0
        %v1441 = vmax.f32 %v1079, 0.0
        %v1442 = vmax.f32 %v1128, 0.0
        %v1443 = vmax.f32 %v1177, 0.0
        %v1444 = vmax.f32 %v1226, 0.0
        %v1445 = vmax.f32 %v1275, 0.0
        %v1446 = vmax.f32 %v1324, 0.0
        %v1447 = vmax.f32 %v1373, 0.0
        %v1448 = vmax.f32 %v1033, 0.0
        %v1449 = vmax.f32 %v1082, 0.0
        %v1450 = vmax.f32 %v1131, 0.0
        %v1451 = vmax.f32 %v1180, 0.0
        %v1452 = vmax.f32 %v1229, 0.0
        %v1453 = vmax.f32 %v1278, 0.0
        %v1454 = vmax.f32 %v1327, 0.0
        %v1455 = vmax.f32 %v1376, 0.0
        %v1456 = vmax.f32 %v1035, 0.0
        %v1457 = vmax.f32 %v1084, 0.0
        %v1458 = vmax.f32 %v1133, 0.0
        %v1459 = vmax.f32 %v1182, 0.0
        %v1460 = vmax.f32 %v1231, 0.0
        %v1461 = vmax.f32 %v1280, 0.0
        %v1462 = vmax.f32 %v1329, 0.0
        %v1463 = vmax.f32 %v1378, 0.0
        %v1464 = vmax.f32 %v1038, 0.0
        %v1465 = vmax.f32 %v1087, 0.0
        %v1466 = vmax.f32 %v1136, 0.0
        %v1467 = vmax.f32 %v1185, 0.0
        %v1468 = vmax.f32 %v1234, 0.0
        %v1469 = vmax.f32 %v1283, 0.0
        %v1470 = vmax.f32 %v1332, 0.0
        %v1471 = vmax.f32 %v1381, 0.0
        %v1472 = vmax.f32 %v1040, 0.0
        %v1473 = vmax.f32 %v1089, 0.0
        %v1474 = vmax.f32 %v1138, 0.0
        %v1475 = vmax.f32 %v1187, 0.0
        %v1476 = vmax.f32 %v1236, 0.0
        %v1477 = vmax.f32 %v1285, 0.0
        %v1478 = vmax.f32 %v1334, 0.0
        %v1479 = vmax.f32 %v1383, 0.0
        %v1480 = vmax.f32 %v1043, 0.0
        %v1481 = vmax.f32 %v1092, 0.0
        %v1482 = vmax.f32 %v1141, 0.0
        %v1483 = vmax.f32 %v1190, 0.0
        %v1484 = vmax.f32 %v1239, 0.0
        %v1485 = vmax.f32 %v1288, 0.0
        %v1486 = vmax.f32 %v1337, 0.0
        %v1487 = vmax.f32 %v1386, 0.0
        %v1488 = vmax.f32 %v1045, 0.0
        %v1489 = vmax.f32 %v1094, 0.0
        %v1490 = vmax.f32 %v1143, 0.0
        %v1491 = vmax.f32 %v1192, 0.0
        %v1492 = vmax.f32 %v1241, 0.0
        %v1493 = vmax.f32 %v1290, 0.0
        %v1494 = vmax.f32 %v1339, 0.0
        %v1495 = vmax.f32 %v1388, 0.0
        %v1496 = vmax.f32 %v1048, 0.0
        %v1497 = vmax.f32 %v1097, 0.0
        %v1498 = vmax.f32 %v1146, 0.0
        %v1499 = vmax.f32 %v1195, 0.0
        %v1500 = vmax.f32 %v1244, 0.0
        %v1501 = vmax.f32 %v1293, 0.0
        %v1502 = vmax.f32 %v1342, 0.0
        %v1503 = vmax.f32 %v1391, 0.0
        %v1504 = vmax.f32 %v1050, 0.0
        %v1505 = vmax.f32 %v1099, 0.0
        %v1506 = vmax.f32 %v1148, 0.0
        %v1507 = vmax.f32 %v1197, 0.0
        %v1508 = vmax.f32 %v1246, 0.0
        %v1509 = vmax.f32 %v1295, 0.0
        %v1510 = vmax.f32 %v1344, 0.0
        %v1511 = vmax.f32 %v1393, 0.0
        %v1512 = vmax.f32 %v1053, 0.0
        %v1513 = vmax.f32 %v1102, 0.0
        %v1514 = vmax.f32 %v1151, 0.0
        %v1515 = vmax.f32 %v1200, 0.0
        %v1516 = vmax.f32 %v1249, 0.0
        %v1517 = vmax.f32 %v1298, 0.0
        %v1518 = vmax.f32 %v1347, 0.0
        %v1519 = vmax.f32 %v1396, 0.0
        %v1520 = vmax.f32 %v1055, 0.0
        %v1521 = vmax.f32 %v1104, 0.0
        %v1522 = vmax.f32 %v1153, 0.0
        %v1523 = vmax.f32 %v1202, 0.0
        %v1524 = vmax.f32 %v1251, 0.0
        %v1525 = vmax.f32 %v1300, 0.0
        %v1526 = vmax.f32 %v1349, 0.0
        %v1527 = vmax.f32 %v1398, 0.0
        %s1528 = smul.u32 %s26, 128
        %v1529 = vlaneseq
        %v1530 = vshrl.u32 %v1529, 7
        %v1531 = vadd.s32 %v1530, 8
        %v1532 = vadd.s32 %v1530, 16
        %v1533 = vadd.s32 %v1530, 24
        %v1534 = vadd.s32 %v1530, 32
        %v1535 = vadd.s32 %v1530, 40
        %v1536 = vadd.s32 %v1530, 48
        %v1537 = vadd.s32 %v1530, 56
        %v1538 = vadd.s32 %v1530, 64
        %v1539 = vadd.s32 %v1530, 72
        %v1540 = vadd.s32 %v1530, 80
        %v1541 = vadd.s32 %v1530, 88
        %v1542 = vadd.s32 %v1530, 96
        %v1543 = vadd.s32 %v1530, 104
        %v1544 = vadd.s32 %v1530, 112
        %v1545 = vadd.s32 %v1530, 120
        %v1546 = vstv %s1528
        %v1547 = vadd.s32 %v1546, %v1530
        %v1548 = vadd.s32 %v1546, %v1531
        %v1549 = vadd.s32 %v1546, %v1532
        %v1550 = vadd.s32 %v1546, %v1533
        %v1551 = vadd.s32 %v1546, %v1534
        %v1552 = vadd.s32 %v1546, %v1535
        %v1553 = vadd.s32 %v1546, %v1536
        %v1554 = vadd.s32 %v1546, %v1537
        %v1555 = vadd.s32 %v1546, %v1538
        %v1556 = vadd.s32 %v1546, %v1539
        %v1557 = vadd.s32 %v1546, %v1540
        %v1558 = vadd.s32 %v1546, %v1541
        %v1559 = vadd.s32 %v1546, %v1542
        %v1560 = vadd.s32 %v1546, %v1543
        %v1561 = vadd.s32 %v1546, %v1544
        %v1562 = vadd.s32 %v1546, %v1545
        %vm1563 = vcmp.lt.s32.totalorder %v1547, 320
        %vm1564 = vcmp.lt.s32.totalorder %v1548, 320
        %vm1565 = vcmp.lt.s32.totalorder %v1549, 320
        %vm1566 = vcmp.lt.s32.totalorder %v1550, 320
        %vm1567 = vcmp.lt.s32.totalorder %v1551, 320
        %vm1568 = vcmp.lt.s32.totalorder %v1552, 320
        %vm1569 = vcmp.lt.s32.totalorder %v1553, 320
        %vm1570 = vcmp.lt.s32.totalorder %v1554, 320
        %vm1571 = vcmp.lt.s32.totalorder %v1555, 320
        %vm1572 = vcmp.lt.s32.totalorder %v1556, 320
        %vm1573 = vcmp.lt.s32.totalorder %v1557, 320
        %vm1574 = vcmp.lt.s32.totalorder %v1558, 320
        %vm1575 = vcmp.lt.s32.totalorder %v1559, 320
        %vm1576 = vcmp.lt.s32.totalorder %v1560, 320
        %vm1577 = vcmp.lt.s32.totalorder %v1561, 320
        %vm1578 = vcmp.lt.s32.totalorder %v1562, 320
        %v1579 = vsel %vm1563, 1, 0
        %v1580 = vsel %vm1564, 1, 0
        %v1581 = vsel %vm1565, 1, 0
        %v1582 = vsel %vm1566, 1, 0
        %v1583 = vsel %vm1567, 1, 0
        %v1584 = vsel %vm1568, 1, 0
        %v1585 = vsel %vm1569, 1, 0
        %v1586 = vsel %vm1570, 1, 0
        %v1587 = vsel %vm1571, 1, 0
        %v1588 = vsel %vm1572, 1, 0
        %v1589 = vsel %vm1573, 1, 0
        %v1590 = vsel %vm1574, 1, 0
        %v1591 = vsel %vm1575, 1, 0
        %v1592 = vsel %vm1576, 1, 0
        %v1593 = vsel %vm1577, 1, 0
        %v1594 = vsel %vm1578, 1, 0
        %vm1595 = vcmp.eq.s32.totalorder %v1579, 1
        %vm1596 = vcmp.eq.s32.totalorder %v1580, 1
        %vm1597 = vcmp.eq.s32.totalorder %v1581, 1
        %vm1598 = vcmp.eq.s32.totalorder %v1582, 1
        %vm1599 = vcmp.eq.s32.totalorder %v1583, 1
        %vm1600 = vcmp.eq.s32.totalorder %v1584, 1
        %vm1601 = vcmp.eq.s32.totalorder %v1585, 1
        %vm1602 = vcmp.eq.s32.totalorder %v1586, 1
        %vm1603 = vcmp.eq.s32.totalorder %v1587, 1
        %vm1604 = vcmp.eq.s32.totalorder %v1588, 1
        %vm1605 = vcmp.eq.s32.totalorder %v1589, 1
        %vm1606 = vcmp.eq.s32.totalorder %v1590, 1
        %vm1607 = vcmp.eq.s32.totalorder %v1591, 1
        %vm1608 = vcmp.eq.s32.totalorder %v1592, 1
        %vm1609 = vcmp.eq.s32.totalorder %v1593, 1
        %vm1610 = vcmp.eq.s32.totalorder %v1594, 1
        %v1611 = vsel %vm1595, %v1400, 0.0
        %v1612 = vsel %vm1595, %v1401, 0.0
        %v1613 = vsel %vm1595, %v1402, 0.0
        %v1614 = vsel %vm1595, %v1403, 0.0
        %v1615 = vsel %vm1595, %v1404, 0.0
        %v1616 = vsel %vm1595, %v1405, 0.0
        %v1617 = vsel %vm1595, %v1406, 0.0
        %v1618 = vsel %vm1595, %v1407, 0.0
        %v1619 = vsel %vm1596, %v1408, 0.0
        %v1620 = vsel %vm1596, %v1409, 0.0
        %v1621 = vsel %vm1596, %v1410, 0.0
        %v1622 = vsel %vm1596, %v1411, 0.0
        %v1623 = vsel %vm1596, %v1412, 0.0
        %v1624 = vsel %vm1596, %v1413, 0.0
        %v1625 = vsel %vm1596, %v1414, 0.0
        %v1626 = vsel %vm1596, %v1415, 0.0
        %v1627 = vsel %vm1597, %v1416, 0.0
        %v1628 = vsel %vm1597, %v1417, 0.0
        %v1629 = vsel %vm1597, %v1418, 0.0
        %v1630 = vsel %vm1597, %v1419, 0.0
        %v1631 = vsel %vm1597, %v1420, 0.0
        %v1632 = vsel %vm1597, %v1421, 0.0
        %v1633 = vsel %vm1597, %v1422, 0.0
        %v1634 = vsel %vm1597, %v1423, 0.0
        %v1635 = vsel %vm1598, %v1424, 0.0
        %v1636 = vsel %vm1598, %v1425, 0.0
        %v1637 = vsel %vm1598, %v1426, 0.0
        %v1638 = vsel %vm1598, %v1427, 0.0
        %v1639 = vsel %vm1598, %v1428, 0.0
        %v1640 = vsel %vm1598, %v1429, 0.0
        %v1641 = vsel %vm1598, %v1430, 0.0
        %v1642 = vsel %vm1598, %v1431, 0.0
        %v1643 = vsel %vm1599, %v1432, 0.0
        %v1644 = vsel %vm1599, %v1433, 0.0
        %v1645 = vsel %vm1599, %v1434, 0.0
        %v1646 = vsel %vm1599, %v1435, 0.0
        %v1647 = vsel %vm1599, %v1436, 0.0
        %v1648 = vsel %vm1599, %v1437, 0.0
        %v1649 = vsel %vm1599, %v1438, 0.0
        %v1650 = vsel %vm1599, %v1439, 0.0
        %v1651 = vsel %vm1600, %v1440, 0.0
        %v1652 = vsel %vm1600, %v1441, 0.0
        %v1653 = vsel %vm1600, %v1442, 0.0
        %v1654 = vsel %vm1600, %v1443, 0.0
        %v1655 = vsel %vm1600, %v1444, 0.0
        %v1656 = vsel %vm1600, %v1445, 0.0
        %v1657 = vsel %vm1600, %v1446, 0.0
        %v1658 = vsel %vm1600, %v1447, 0.0
        %v1659 = vsel %vm1601, %v1448, 0.0
        %v1660 = vsel %vm1601, %v1449, 0.0
        %v1661 = vsel %vm1601, %v1450, 0.0
        %v1662 = vsel %vm1601, %v1451, 0.0
        %v1663 = vsel %vm1601, %v1452, 0.0
        %v1664 = vsel %vm1601, %v1453, 0.0
        %v1665 = vsel %vm1601, %v1454, 0.0
        %v1666 = vsel %vm1601, %v1455, 0.0
        %v1667 = vsel %vm1602, %v1456, 0.0
        %v1668 = vsel %vm1602, %v1457, 0.0
        %v1669 = vsel %vm1602, %v1458, 0.0
        %v1670 = vsel %vm1602, %v1459, 0.0
        %v1671 = vsel %vm1602, %v1460, 0.0
        %v1672 = vsel %vm1602, %v1461, 0.0
        %v1673 = vsel %vm1602, %v1462, 0.0
        %v1674 = vsel %vm1602, %v1463, 0.0
        %v1675 = vsel %vm1603, %v1464, 0.0
        %v1676 = vsel %vm1603, %v1465, 0.0
        %v1677 = vsel %vm1603, %v1466, 0.0
        %v1678 = vsel %vm1603, %v1467, 0.0
        %v1679 = vsel %vm1603, %v1468, 0.0
        %v1680 = vsel %vm1603, %v1469, 0.0
        %v1681 = vsel %vm1603, %v1470, 0.0
        %v1682 = vsel %vm1603, %v1471, 0.0
        %v1683 = vsel %vm1604, %v1472, 0.0
        %v1684 = vsel %vm1604, %v1473, 0.0
        %v1685 = vsel %vm1604, %v1474, 0.0
        %v1686 = vsel %vm1604, %v1475, 0.0
        %v1687 = vsel %vm1604, %v1476, 0.0
        %v1688 = vsel %vm1604, %v1477, 0.0
        %v1689 = vsel %vm1604, %v1478, 0.0
        %v1690 = vsel %vm1604, %v1479, 0.0
        %v1691 = vsel %vm1605, %v1480, 0.0
        %v1692 = vsel %vm1605, %v1481, 0.0
        %v1693 = vsel %vm1605, %v1482, 0.0
        %v1694 = vsel %vm1605, %v1483, 0.0
        %v1695 = vsel %vm1605, %v1484, 0.0
        %v1696 = vsel %vm1605, %v1485, 0.0
        %v1697 = vsel %vm1605, %v1486, 0.0
        %v1698 = vsel %vm1605, %v1487, 0.0
        %v1699 = vsel %vm1606, %v1488, 0.0
        %v1700 = vsel %vm1606, %v1489, 0.0
        %v1701 = vsel %vm1606, %v1490, 0.0
        %v1702 = vsel %vm1606, %v1491, 0.0
        %v1703 = vsel %vm1606, %v1492, 0.0
        %v1704 = vsel %vm1606, %v1493, 0.0
        %v1705 = vsel %vm1606, %v1494, 0.0
        %v1706 = vsel %vm1606, %v1495, 0.0
        %v1707 = vsel %vm1607, %v1496, 0.0
        %v1708 = vsel %vm1607, %v1497, 0.0
        %v1709 = vsel %vm1607, %v1498, 0.0
        %v1710 = vsel %vm1607, %v1499, 0.0
        %v1711 = vsel %vm1607, %v1500, 0.0
        %v1712 = vsel %vm1607, %v1501, 0.0
        %v1713 = vsel %vm1607, %v1502, 0.0
        %v1714 = vsel %vm1607, %v1503, 0.0
        %v1715 = vsel %vm1608, %v1504, 0.0
        %v1716 = vsel %vm1608, %v1505, 0.0
        %v1717 = vsel %vm1608, %v1506, 0.0
        %v1718 = vsel %vm1608, %v1507, 0.0
        %v1719 = vsel %vm1608, %v1508, 0.0
        %v1720 = vsel %vm1608, %v1509, 0.0
        %v1721 = vsel %vm1608, %v1510, 0.0
        %v1722 = vsel %vm1608, %v1511, 0.0
        %v1723 = vsel %vm1609, %v1512, 0.0
        %v1724 = vsel %vm1609, %v1513, 0.0
        %v1725 = vsel %vm1609, %v1514, 0.0
        %v1726 = vsel %vm1609, %v1515, 0.0
        %v1727 = vsel %vm1609, %v1516, 0.0
        %v1728 = vsel %vm1609, %v1517, 0.0
        %v1729 = vsel %vm1609, %v1518, 0.0
        %v1730 = vsel %vm1609, %v1519, 0.0
        %v1731 = vsel %vm1610, %v1520, 0.0
        %v1732 = vsel %vm1610, %v1521, 0.0
        %v1733 = vsel %vm1610, %v1522, 0.0
        %v1734 = vsel %vm1610, %v1523, 0.0
        %v1735 = vsel %vm1610, %v1524, 0.0
        %v1736 = vsel %vm1610, %v1525, 0.0
        %v1737 = vsel %vm1610, %v1526, 0.0
        %v1738 = vsel %vm1610, %v1527, 0.0
        %v1739 = vmax.f32 %v1611, %v1619
        %v1740 = vmax.f32 %v1739, %v1627
        %v1741 = vmax.f32 %v1740, %v1635
        %v1742 = vmax.f32 %v1741, %v1643
        %v1743 = vmax.f32 %v1742, %v1651
        %v1744 = vmax.f32 %v1743, %v1659
        %v1745 = vmax.f32 %v1744, %v1667
        %v1746 = vmax.f32 %v1745, %v1675
        %v1747 = vmax.f32 %v1746, %v1683
        %v1748 = vmax.f32 %v1747, %v1691
        %v1749 = vmax.f32 %v1748, %v1699
        %v1750 = vmax.f32 %v1749, %v1707
        %v1751 = vmax.f32 %v1750, %v1715
        %v1752 = vmax.f32 %v1751, %v1723
        %v1753 = vmax.f32 %v1752, %v1731
        %v1754 = vmax.f32 %v1612, %v1620
        %v1755 = vmax.f32 %v1754, %v1628
        %v1756 = vmax.f32 %v1755, %v1636
        %v1757 = vmax.f32 %v1756, %v1644
        %v1758 = vmax.f32 %v1757, %v1652
        %v1759 = vmax.f32 %v1758, %v1660
        %v1760 = vmax.f32 %v1759, %v1668
        %v1761 = vmax.f32 %v1760, %v1676
        %v1762 = vmax.f32 %v1761, %v1684
        %v1763 = vmax.f32 %v1762, %v1692
        %v1764 = vmax.f32 %v1763, %v1700
        %v1765 = vmax.f32 %v1764, %v1708
        %v1766 = vmax.f32 %v1765, %v1716
        %v1767 = vmax.f32 %v1766, %v1724
        %v1768 = vmax.f32 %v1767, %v1732
        %v1769 = vmax.f32 %v1613, %v1621
        %v1770 = vmax.f32 %v1769, %v1629
        %v1771 = vmax.f32 %v1770, %v1637
        %v1772 = vmax.f32 %v1771, %v1645
        %v1773 = vmax.f32 %v1772, %v1653
        %v1774 = vmax.f32 %v1773, %v1661
        %v1775 = vmax.f32 %v1774, %v1669
        %v1776 = vmax.f32 %v1775, %v1677
        %v1777 = vmax.f32 %v1776, %v1685
        %v1778 = vmax.f32 %v1777, %v1693
        %v1779 = vmax.f32 %v1778, %v1701
        %v1780 = vmax.f32 %v1779, %v1709
        %v1781 = vmax.f32 %v1780, %v1717
        %v1782 = vmax.f32 %v1781, %v1725
        %v1783 = vmax.f32 %v1782, %v1733
        %v1784 = vmax.f32 %v1614, %v1622
        %v1785 = vmax.f32 %v1784, %v1630
        %v1786 = vmax.f32 %v1785, %v1638
        %v1787 = vmax.f32 %v1786, %v1646
        %v1788 = vmax.f32 %v1787, %v1654
        %v1789 = vmax.f32 %v1788, %v1662
        %v1790 = vmax.f32 %v1789, %v1670
        %v1791 = vmax.f32 %v1790, %v1678
        %v1792 = vmax.f32 %v1791, %v1686
        %v1793 = vmax.f32 %v1792, %v1694
        %v1794 = vmax.f32 %v1793, %v1702
        %v1795 = vmax.f32 %v1794, %v1710
        %v1796 = vmax.f32 %v1795, %v1718
        %v1797 = vmax.f32 %v1796, %v1726
        %v1798 = vmax.f32 %v1797, %v1734
        %v1799 = vmax.f32 %v1615, %v1623
        %v1800 = vmax.f32 %v1799, %v1631
        %v1801 = vmax.f32 %v1800, %v1639
        %v1802 = vmax.f32 %v1801, %v1647
        %v1803 = vmax.f32 %v1802, %v1655
        %v1804 = vmax.f32 %v1803, %v1663
        %v1805 = vmax.f32 %v1804, %v1671
        %v1806 = vmax.f32 %v1805, %v1679
        %v1807 = vmax.f32 %v1806, %v1687
        %v1808 = vmax.f32 %v1807, %v1695
        %v1809 = vmax.f32 %v1808, %v1703
        %v1810 = vmax.f32 %v1809, %v1711
        %v1811 = vmax.f32 %v1810, %v1719
        %v1812 = vmax.f32 %v1811, %v1727
        %v1813 = vmax.f32 %v1812, %v1735
        %v1814 = vmax.f32 %v1616, %v1624
        %v1815 = vmax.f32 %v1814, %v1632
        %v1816 = vmax.f32 %v1815, %v1640
        %v1817 = vmax.f32 %v1816, %v1648
        %v1818 = vmax.f32 %v1817, %v1656
        %v1819 = vmax.f32 %v1818, %v1664
        %v1820 = vmax.f32 %v1819, %v1672
        %v1821 = vmax.f32 %v1820, %v1680
        %v1822 = vmax.f32 %v1821, %v1688
        %v1823 = vmax.f32 %v1822, %v1696
        %v1824 = vmax.f32 %v1823, %v1704
        %v1825 = vmax.f32 %v1824, %v1712
        %v1826 = vmax.f32 %v1825, %v1720
        %v1827 = vmax.f32 %v1826, %v1728
        %v1828 = vmax.f32 %v1827, %v1736
        %v1829 = vmax.f32 %v1617, %v1625
        %v1830 = vmax.f32 %v1829, %v1633
        %v1831 = vmax.f32 %v1830, %v1641
        %v1832 = vmax.f32 %v1831, %v1649
        %v1833 = vmax.f32 %v1832, %v1657
        %v1834 = vmax.f32 %v1833, %v1665
        %v1835 = vmax.f32 %v1834, %v1673
        %v1836 = vmax.f32 %v1835, %v1681
        %v1837 = vmax.f32 %v1836, %v1689
        %v1838 = vmax.f32 %v1837, %v1697
        %v1839 = vmax.f32 %v1838, %v1705
        %v1840 = vmax.f32 %v1839, %v1713
        %v1841 = vmax.f32 %v1840, %v1721
        %v1842 = vmax.f32 %v1841, %v1729
        %v1843 = vmax.f32 %v1842, %v1737
        %v1844 = vmax.f32 %v1618, %v1626
        %v1845 = vmax.f32 %v1844, %v1634
        %v1846 = vmax.f32 %v1845, %v1642
        %v1847 = vmax.f32 %v1846, %v1650
        %v1848 = vmax.f32 %v1847, %v1658
        %v1849 = vmax.f32 %v1848, %v1666
        %v1850 = vmax.f32 %v1849, %v1674
        %v1851 = vmax.f32 %v1850, %v1682
        %v1852 = vmax.f32 %v1851, %v1690
        %v1853 = vmax.f32 %v1852, %v1698
        %v1854 = vmax.f32 %v1853, %v1706
        %v1855 = vmax.f32 %v1854, %v1714
        %v1856 = vmax.f32 %v1855, %v1722
        %v1857 = vmax.f32 %v1856, %v1730
        %v1858 = vmax.f32 %v1857, %v1738
        %p1859 = scmp.eq.s32.totalorder %s26, 0
        // Predicated region
        $region49: #{tpu_custom_call.1} parent=47 // pred_check
          %p1860 = pneg %p1859
        $region50: #{tpu_custom_call.1} parent=47 // pred_check_branch
          %1862 = sbr.rel (%p1860) target = $region52
        $region51: #{tpu_custom_call.1} parent=47 // pred_region
          %1863 = vst [vmem:[#allocation2] sm:$0xff] 0.0
          %1864 = vst [vmem:[#allocation2 + $0x8] sm:$0xff] 0.0
          %1865 = vst [vmem:[#allocation2 + $0x10] sm:$0xff] 0.0
          %1866 = vst [vmem:[#allocation2 + $0x18] sm:$0xff] 0.0
          %1867 = vst [vmem:[#allocation2 + $0x20] sm:$0xff] 0.0
          %1868 = vst [vmem:[#allocation2 + $0x28] sm:$0xff] 0.0
          %1869 = vst [vmem:[#allocation2 + $0x30] sm:$0xff] 0.0
          %1870 = vst [vmem:[#allocation2 + $0x38] sm:$0xff] 0.0
        $region52: #{tpu_custom_call.1} parent=47 // pred_fallthru
          _
        %v1871 = vld [vmem:[#allocation2] sm:$0xff]
        %v1872 = vld [vmem:[#allocation2 + $0x8] sm:$0xff]
        %v1873 = vld [vmem:[#allocation2 + $0x10] sm:$0xff]
        %v1874 = vld [vmem:[#allocation2 + $0x18] sm:$0xff]
        %v1875 = vld [vmem:[#allocation2 + $0x20] sm:$0xff]
        %v1876 = vld [vmem:[#allocation2 + $0x28] sm:$0xff]
        %v1877 = vld [vmem:[#allocation2 + $0x30] sm:$0xff]
        %v1878 = vld [vmem:[#allocation2 + $0x38] sm:$0xff]
        %v1879 = vmax.f32 %v1871, %v1753
        %v1880 = vmax.f32 %v1872, %v1768
        %v1881 = vmax.f32 %v1873, %v1783
        %v1882 = vmax.f32 %v1874, %v1798
        %v1883 = vmax.f32 %v1875, %v1813
        %v1884 = vmax.f32 %v1876, %v1828
        %v1885 = vmax.f32 %v1877, %v1843
        %v1886 = vmax.f32 %v1878, %v1858
        %1887 = vst [vmem:[#allocation2] sm:$0xff] %v1879
        %1888 = vst [vmem:[#allocation2 + $0x8] sm:$0xff] %v1880
        %1889 = vst [vmem:[#allocation2 + $0x10] sm:$0xff] %v1881
        %1890 = vst [vmem:[#allocation2 + $0x18] sm:$0xff] %v1882
        %1891 = vst [vmem:[#allocation2 + $0x20] sm:$0xff] %v1883
        %1892 = vst [vmem:[#allocation2 + $0x28] sm:$0xff] %v1884
        %1893 = vst [vmem:[#allocation2 + $0x30] sm:$0xff] %v1885
        %1894 = vst [vmem:[#allocation2 + $0x38] sm:$0xff] %v1886
        %p1895 = scmp.eq.s32.totalorder %s26, 2
        // Predicated region
        $region53: #{tpu_custom_call.1} parent=47 // pred_check
          %p1896 = pneg %p1895
        $region54: #{tpu_custom_call.1} parent=47 // pred_check_branch
          %1898 = sbr.rel (%p1896) target = $region56
        $region55: #{tpu_custom_call.1} parent=47 // pred_region
          %v1899 = vld [vmem:[#allocation2] sm:$0xff]
          %v1900 = vld [vmem:[#allocation2 + $0x8] sm:$0xff]
          %v1901 = vld [vmem:[#allocation2 + $0x10] sm:$0xff]
          %v1902 = vld [vmem:[#allocation2 + $0x18] sm:$0xff]
          %v1903 = vld [vmem:[#allocation2 + $0x20] sm:$0xff]
          %v1904 = vld [vmem:[#allocation2 + $0x28] sm:$0xff]
          %v1905 = vld [vmem:[#allocation2 + $0x30] sm:$0xff]
          %v1906 = vld [vmem:[#allocation2 + $0x38] sm:$0xff]
          %v1907 = vrot.slane %v1899, 4
          %v1908 = vmax.f32 %v1899, %v1907
          %v1909 = vrot.slane %v1908, 2
          %v1910 = vmax.f32 %v1908, %v1909
          %v1911 = vrot.slane %v1910, 1
          %v1912 = vmax.f32 %v1910, %v1911
          %v1913 = vrot.slane %v1900, 4
          %v1914 = vmax.f32 %v1900, %v1913
          %v1915 = vrot.slane %v1914, 2
          %v1916 = vmax.f32 %v1914, %v1915
          %v1917 = vrot.slane %v1916, 1
          %v1918 = vmax.f32 %v1916, %v1917
          %v1919 = vrot.slane %v1901, 4
          %v1920 = vmax.f32 %v1901, %v1919
          %v1921 = vrot.slane %v1920, 2
          %v1922 = vmax.f32 %v1920, %v1921
          %v1923 = vrot.slane %v1922, 1
          %v1924 = vmax.f32 %v1922, %v1923
          %v1925 = vrot.slane %v1902, 4
          %v1926 = vmax.f32 %v1902, %v1925
          %v1927 = vrot.slane %v1926, 2
          %v1928 = vmax.f32 %v1926, %v1927
          %v1929 = vrot.slane %v1928, 1
          %v1930 = vmax.f32 %v1928, %v1929
          %v1931 = vrot.slane %v1903, 4
          %v1932 = vmax.f32 %v1903, %v1931
          %v1933 = vrot.slane %v1932, 2
          %v1934 = vmax.f32 %v1932, %v1933
          %v1935 = vrot.slane %v1934, 1
          %v1936 = vmax.f32 %v1934, %v1935
          %v1937 = vrot.slane %v1904, 4
          %v1938 = vmax.f32 %v1904, %v1937
          %v1939 = vrot.slane %v1938, 2
          %v1940 = vmax.f32 %v1938, %v1939
          %v1941 = vrot.slane %v1940, 1
          %v1942 = vmax.f32 %v1940, %v1941
          %v1943 = vrot.slane %v1905, 4
          %v1944 = vmax.f32 %v1905, %v1943
          %v1945 = vrot.slane %v1944, 2
          %v1946 = vmax.f32 %v1944, %v1945
          %v1947 = vrot.slane %v1946, 1
          %v1948 = vmax.f32 %v1946, %v1947
          %v1949 = vrot.slane %v1906, 4
          %v1950 = vmax.f32 %v1906, %v1949
          %v1951 = vrot.slane %v1950, 2
          %v1952 = vmax.f32 %v1950, %v1951
          %v1953 = vrot.slane %v1952, 1
          %v1954 = vmax.f32 %v1952, %v1953
          %v1963 = vrot.slane %v1918, 7
          %v1964 = vrot.slane %v1924, 6
          %v1965 = vrot.slane %v1930, 5
          %v1966 = vrot.slane %v1936, 4
          %v1967 = vrot.slane %v1942, 3
          %v1968 = vrot.slane %v1948, 2
          %v1969 = vrot.slane %v1954, 1
          %v1970 = vsel %vm392, %v1912, %v1963
          %vm1971 = vcmask 1042434
          %v1972 = vsel %vm1971, %v1964, %v1965
          %v1973 = vsel %vm393, %v1970, %v1972
          %vm1974 = vcmask 1044484
          %v1975 = vsel %vm1974, %v1966, %v1967
          %vm1976 = vcmask 1046534
          %v1977 = vsel %vm1976, %v1968, %v1969
          %vm1978 = vcmask 1045508
          %v1979 = vsel %vm1978, %v1975, %v1977
          %vm1980 = vcmask 1043456
          %v1981 = vsel %vm1980, %v1973, %v1979
          %1983 = vst [vmem:[%s294] sm:$0xff] %v1981
        $region56: #{tpu_custom_call.1} parent=47 // pred_fallthru
          _
        %s1984 = sand.u32 %s195, 1
        %s1985 = scalar_lea.sflag [#allocation4], %s1984
        %s1986 = sand.u32 %s195, 1
        %s1987 = smul.addr %s1986, 8
        %s1988 = scalar_lea.vmem [#allocation3], %s1987
        // Predicated region
        $region57: #{tpu_custom_call.1} parent=47 // pred_check
          %p1989 = pneg %p205
        $region58: #{tpu_custom_call.1} parent=47 // pred_check_branch
          %1991 = sbr.rel (%p1989) target = $region60
        $region59: #{tpu_custom_call.1} parent=47 // pred_region
          %1993 = vsyncadd %s1985, 0
          %s1994 = smul.addr %s25, 8
          %s1995 = scalar_lea.hbm %s7, %s1994
          %s1997 = sshll.u32 %s1988, 4
          %s1998 = int_to_ptr.vmem [resolvable:$true] %s1997
          %s1999 = sshll.u32 %s1995, 4
          %s2000 = int_to_ptr.hbm [resolvable:$true] %s1999
          %2002 = dma.vmem_to_hbm [thread:$0]  %s1998, 128, %s2000, %s1985
        $region60: #{tpu_custom_call.1} parent=47 // pred_fallthru
          _
      $region48: #{tpu_custom_call.1} parent=5 // pred_fallthru
        _
      %p2003 = scmp.le.s32.totalorder 2, %s16
      // Predicated region
      $region61: #{tpu_custom_call.1} parent=5 // pred_check
        %p2004 = pneg %p2003
      $region62: #{tpu_custom_call.1} parent=5 // pred_check_branch
        %2006 = sbr.rel (%p2004) target = $region64
      $region63: #{tpu_custom_call.1} parent=5 // pred_region
        %s2007 = ssub.s32 %s16, 2
        // Predicated region
        $region65: #{tpu_custom_call.1} parent=63 // pred_check
          %p2008 = pneg %p211
        $region66: #{tpu_custom_call.1} parent=63 // pred_check_branch
          %2010 = sbr.rel (%p2008) target = $region68
        $region67: #{tpu_custom_call.1} parent=63 // pred_region
          %s2011 = sand.u32 %s196, 1
          %s2012 = scalar_lea.sflag [#allocation4], %s2011
          %s2013 = sand.u32 %s196, 1
          %s2014 = smul.addr %s2013, 8
          %s2015 = scalar_lea.vmem [#allocation3], %s2014
          %2017 = dma.done %s2012, 128
        $region68: #{tpu_custom_call.1} parent=63 // pred_fallthru
          _
      $region64: #{tpu_custom_call.1} parent=5 // pred_fallthru
        _
    $region6: #{tpu_custom_call.1} parent=1 // loop_footer
      %s20 = sadd.s32 1, %s16
    $region7: #{tpu_custom_call.1} parent=1 // loop_footer_branch
      %15 = sbr.rel target = $region3
    $region8: #{tpu_custom_call.1} parent=1 // loop_exit
      _
    %2018 = vsyncpa [#allocation4], 1
    %s2019 = scalar_lea.sflag [#allocation4], 1
    %2020 = vsyncpa %s2019, 1

</llo_original>
